<compile_context>
chip_gen: v7x
topology: tpu7x:2x2x1
jax: 0.10.0
libtpu: 0.0.40
codegen_flags: <defaults>
</compile_context>

<pallas_src>
import functools

import jax
import jax.numpy as jnp
from jax.experimental import pallas as pl
from jax.experimental.pallas import tpu as pltpu

LN_EPS = 1e-5  # nn.LayerNorm default eps


# ----------------------------- kernel ---------------------------------------


def attention_kernel(x_ref, g_ref, b_ref, wqkv_ref, wo_ref, out_ref, *,
                     heads, dim_head):
    # x_ref   : (N, D)            activations for one batch element (f32)
    # g/b     : (1, D)            LayerNorm affine (f32)
    # wqkv    : (D, 3*H*dh) bf16  [ q_h0..q_hH-1 | k_h0.. | v_h0.. ], scale in q
    # wo      : (H*dh, D)   bf16  to_out weight (original orientation)
    x = x_ref[...].astype(jnp.float32)                       # (N, D)
    dh = dim_head

    # LayerNorm (biased variance, eps inside rsqrt, affine) == nn.LayerNorm.
    mu = jnp.mean(x, axis=-1, keepdims=True)
    var = jnp.mean((x - mu) ** 2, axis=-1, keepdims=True)
    xn = (x - mu) * jax.lax.rsqrt(var + LN_EPS) * g_ref[...] + b_ref[...]

    # Fused q|k|v projection: one lane-dense matmul, contraction over full D.
    # bf16 operands, f32 accumulation.
    qkv = jnp.dot(xn.astype(jnp.bfloat16), wqkv_ref[...],
                  preferred_element_type=jnp.float32)        # (N, 3*inner) f32

    # Head split: static lane slices stacked on a new leading (major) axis.
    def heads_of(base):                                      # -> (H, N, dh) f32
        return jnp.stack(
            [qkv[:, (base + h) * dh:(base + h + 1) * dh] for h in range(heads)],
            axis=0)

    q = heads_of(0).astype(jnp.bfloat16)                     # scale folded in wq
    k = heads_of(heads).astype(jnp.bfloat16)
    v = heads_of(2 * heads).astype(jnp.bfloat16)

    # Scaled dot-product attention, all heads in one leading-batch contraction.
    s = jnp.einsum('hqe,hke->hqk', q, k,
                   preferred_element_type=jnp.float32)       # (H, N, N) f32
    s = s - jnp.max(s, axis=-1, keepdims=True)
    e = jnp.exp(s)                                           # softmax kept in f32
    attn = e * pl.reciprocal(jnp.sum(e, axis=-1, keepdims=True), approx=True)

    o = jnp.einsum('hqk,hke->hqe', attn.astype(jnp.bfloat16), v,
                   preferred_element_type=jnp.float32)       # (H, N, dh) f32

    # Concat heads back onto lanes, then a single full-depth to_out matmul.
    o_cat = jnp.concatenate([o[h] for h in range(heads)],
                            axis=-1).astype(jnp.bfloat16)    # (N, inner)
    y = jnp.dot(o_cat, wo_ref[...],
                preferred_element_type=jnp.float32)          # (N, D) f32
    out_ref[...] = y.astype(out_ref.dtype)


# ----------------------------- wrapper ---------------------------------------


@functools.partial(jax.jit, static_argnames=("heads", "dim_head"))
def attention_forward(x, w, *, heads, dim_head):
    B, N, D = x.shape
    inner = heads * dim_head

    kernel = functools.partial(attention_kernel, heads=heads, dim_head=dim_head)

    def const_spec(shape):
        # Constant-per-grid-step blocks: single-buffer them (no need for the
        # second pipeline buffer; the block index never changes).
        return pl.BlockSpec(shape, lambda b: (0,) * len(shape),
                            pipeline_mode=pl.Buffered(1))

    return pl.pallas_call(
        kernel,
        out_shape=jax.ShapeDtypeStruct((B, N, D), x.dtype),
        grid=(B,),
        in_specs=[
            pl.BlockSpec((None, N, D), lambda b: (b, 0, 0)),   # x, batch squeezed
            const_spec((1, D)),                                # ln gamma
            const_spec((1, D)),                                # ln beta
            const_spec((D, 3 * inner)),                        # W_qkv (bf16)
            const_spec((inner, D)),                            # W_out (bf16)
        ],
        out_specs=pl.BlockSpec((None, N, D), lambda b: (b, 0, 0)),
        compiler_params=pltpu.CompilerParams(
            dimension_semantics=("parallel",),
            # Raise for ViT-scale shapes on v5e/v6e (128 MiB physical); keep
            # tiles smaller / add head tiling on v7x (64 MiB physical).
            vmem_limit_bytes=32 * 1024 * 1024),
    )(x, w["ln_g"], w["ln_b"], w["w_qkv"], w["w_out"])


# ----------------------------- glue (plain JAX) -------------------------------


def init_attention_params(key, dim, heads, dim_head):
    """Parameters in 'x @ W' orientation: wq/wk/wv (dim, inner), wo (inner, dim)."""
    inner = heads * dim_head
    kq, kk, kv, ko, kg, kb = jax.random.split(key, 6)

    def lin(k, fan_in, fan_out):
        bound = 1.0 / (fan_in ** 0.5)
        return jax.random.uniform(k, (fan_in, fan_out), jnp.float32, -bound, bound)

    return {
        # perturbed LN affine so the affine path is actually exercised
        "ln_g": 1.0 + 0.1 * jax.random.normal(kg, (1, dim), jnp.float32),
        "ln_b": 0.05 * jax.random.normal(kb, (1, dim), jnp.float32),
        "wq": lin(kq, dim, inner),
        "wk": lin(kk, dim, inner),
        "wv": lin(kv, dim, inner),
        "wo": lin(ko, inner, dim),
    }


def stack_attention_weights(params, heads, dim_head):
    """One-time wrapper-side weight re-layout.

    * wq|wk|wv are stacked into a single (dim, 3*inner) slab so the kernel does
      one lane-dense projection matmul; the softmax scale dim_head**-0.5 is
      folded into the q columns (in f32, before the bf16 cast).
    * MXU weights are shipped as bf16 (f32 accumulation in-kernel).
    # TODO(synk): only the default r=None path is built here; for r=int/deep
    # variants compose the bias-free Linear chain into one (dim, inner) matrix
    # first, then stack identically.
    """
    scale = dim_head ** -0.5
    w_qkv = jnp.concatenate(
        [params["wq"] * scale, params["wk"], params["wv"]], axis=-1)
    return {
        "ln_g": params["ln_g"],
        "ln_b": params["ln_b"],
        "w_qkv": w_qkv.astype(jnp.bfloat16),
        "w_out": params["wo"].astype(jnp.bfloat16),
    }


def attention_reference(x, params, heads, dim_head):
    """Plain-JAX (f32) mirror of the PyTorch Attention.forward (r=None)."""
    g, b = params["ln_g"], params["ln_b"]
    mu = jnp.mean(x, -1, keepdims=True)
    var = jnp.mean((x - mu) ** 2, -1, keepdims=True)
    xn = (x - mu) / jnp.sqrt(var + LN_EPS) * g + b
    q, k, v = xn @ params["wq"], xn @ params["wk"], xn @ params["wv"]
    B, N, _ = x.shape

    def split(t):  # 'b n (h d) -> b h n d'
        return jnp.transpose(t.reshape(B, N, heads, dim_head), (0, 2, 1, 3))

    qh, kh, vh = split(q), split(k), split(v)
    dots = jnp.einsum('bhnd,bhmd->bhnm', qh, kh) * (dim_head ** -0.5)
    attn = jax.nn.softmax(dots, axis=-1)
    o = jnp.einsum('bhnm,bhmd->bhnd', attn, vh)
    o = jnp.transpose(o, (0, 2, 1, 3)).reshape(B, N, heads * dim_head)
    return o @ params["wo"]


# ----------------------------- main -------------------------------------------


if __name__ == "__main__":
    B, N, dim, heads, dim_head = 2, 64, 32, 4, 16   # small, module-consistent

    key = jax.random.PRNGKey(0)
    kx, kp = jax.random.split(key)
    x = jax.random.normal(kx, (B, N, dim), jnp.float32)

    params = init_attention_params(kp, dim, heads, dim_head)
    stacked = stack_attention_weights(params, heads, dim_head)

    out = attention_forward(x, stacked, heads=heads, dim_head=dim_head)
    out = jax.block_until_ready(out)
    assert out.shape == (B, N, dim)

    ref = attention_reference(x, params, heads, dim_head)
    max_err = float(jnp.max(jnp.abs(out - ref)))
    # bf16 MXU operands + approx reciprocal: not bit-exact, well within 2e-2.
    assert jnp.allclose(out, ref, rtol=2e-2, atol=2e-2), max_err

    print("KERNEL_OK")
</pallas_src>

<mosaic_0001>
module attributes {stable_mosaic.version = 11 : i64} {
  func.func @attention_kernel(%arg0: i32, %arg1: memref<1x64x32xf32, #tpu.memory_space<vmem>>, %arg2: memref<1x32xf32, #tpu.memory_space<vmem>>, %arg3: memref<1x32xf32, #tpu.memory_space<vmem>>, %arg4: memref<32x192xbf16, #tpu.memory_space<vmem>>, %arg5: memref<64x32xbf16, #tpu.memory_space<vmem>>, %arg6: memref<1x64x32xf32, #tpu.memory_space<vmem>>) attributes {dimension_semantics = [#tpu.dimension_semantics<parallel>], iteration_bounds = array<i64: 2>, scalar_prefetch = 0 : i64, scratch_operands = 0 : i64, tpu.core_type = #tpu.core_type<tc>, window_params = [{transform_indices = @transform_0, window_bounds = array<i64: 1, 64, 32>}, {pipeline_mode = #tpu.pipeline_mode<synchronous>, transform_indices = @transform_1, window_bounds = array<i64: 1, 32>}, {pipeline_mode = #tpu.pipeline_mode<synchronous>, transform_indices = @transform_2, window_bounds = array<i64: 1, 32>}, {pipeline_mode = #tpu.pipeline_mode<synchronous>, transform_indices = @transform_3, window_bounds = array<i64: 32, 192>}, {pipeline_mode = #tpu.pipeline_mode<synchronous>, transform_indices = @transform_4, window_bounds = array<i64: 64, 32>}, {transform_indices = @transform_5, window_bounds = array<i64: 1, 64, 32>}]} {
    %c0 = arith.constant 0 : index
    %c0_0 = arith.constant 0 : index
    %c0_1 = arith.constant 0 : index
    %0 = vector.load %arg1[%c0, %c0_0, %c0_1] : memref<1x64x32xf32, #tpu.memory_space<vmem>>, vector<1x64x32xf32>
    %1 = vector.shape_cast %0 : vector<1x64x32xf32> to vector<64x32xf32>
    %cst = arith.constant dense<0.000000e+00> : vector<64xf32>
    %2 = vector.multi_reduction <add>, %1, %cst [1] : vector<64x32xf32> to vector<64xf32>
    %3 = vector.shape_cast %2 : vector<64xf32> to vector<64x1xf32>
    %cst_2 = arith.constant 3.200000e+01 : f32
    %4 = vector.broadcast %cst_2 : f32 to vector<64x1xf32>
    %5 = arith.divf %3, %4 : vector<64x1xf32>
    %6 = vector.broadcast %5 : vector<64x1xf32> to vector<64x32xf32>
    %7 = arith.subf %1, %6 : vector<64x32xf32>
    %8 = arith.mulf %7, %7 : vector<64x32xf32>
    %cst_3 = arith.constant dense<0.000000e+00> : vector<64xf32>
    %9 = vector.multi_reduction <add>, %8, %cst_3 [1] : vector<64x32xf32> to vector<64xf32>
    %10 = vector.shape_cast %9 : vector<64xf32> to vector<64x1xf32>
    %cst_4 = arith.constant 3.200000e+01 : f32
    %11 = vector.broadcast %cst_4 : f32 to vector<64x1xf32>
    %12 = arith.divf %10, %11 : vector<64x1xf32>
    %13 = vector.broadcast %5 : vector<64x1xf32> to vector<64x32xf32>
    %14 = arith.subf %1, %13 : vector<64x32xf32>
    %cst_5 = arith.constant 9.99999974E-6 : f32
    %15 = vector.broadcast %cst_5 : f32 to vector<64x1xf32>
    %16 = arith.addf %12, %15 : vector<64x1xf32>
    %17 = math.rsqrt %16 : vector<64x1xf32>
    %18 = vector.broadcast %17 : vector<64x1xf32> to vector<64x32xf32>
    %19 = arith.mulf %14, %18 : vector<64x32xf32>
    %c0_6 = arith.constant 0 : index
    %c0_7 = arith.constant 0 : index
    %20 = vector.load %arg2[%c0_6, %c0_7] : memref<1x32xf32, #tpu.memory_space<vmem>>, vector<1x32xf32>
    %21 = vector.broadcast %20 : vector<1x32xf32> to vector<64x32xf32>
    %22 = arith.mulf %19, %21 : vector<64x32xf32>
    %c0_8 = arith.constant 0 : index
    %c0_9 = arith.constant 0 : index
    %23 = vector.load %arg3[%c0_8, %c0_9] : memref<1x32xf32, #tpu.memory_space<vmem>>, vector<1x32xf32>
    %24 = vector.broadcast %23 : vector<1x32xf32> to vector<64x32xf32>
    %25 = arith.addf %22, %24 : vector<64x32xf32>
    %26 = arith.truncf %25 : vector<64x32xf32> to vector<64x32xbf16>
    %c0_10 = arith.constant 0 : index
    %c0_11 = arith.constant 0 : index
    %27 = vector.load %arg4[%c0_10, %c0_11] : memref<32x192xbf16, #tpu.memory_space<vmem>>, vector<32x192xbf16>
    %cst_12 = arith.constant dense<0.000000e+00> : vector<64x192xf32>
    %28 = tpu.matmul %26, %27, %cst_12 {dimension_numbers = #tpu.dot_dimension_numbers<[1], [0], [0], [1], [0, 0, 1, 1], [], []>} : vector<64x32xbf16>, vector<32x192xbf16>, vector<64x192xf32> -> vector<64x192xf32>
    %29 = vector.extract_strided_slice %28 {offsets = [0, 0], sizes = [64, 16], strides = [1, 1]} : vector<64x192xf32> to vector<64x16xf32>
    %30 = vector.extract_strided_slice %28 {offsets = [0, 16], sizes = [64, 16], strides = [1, 1]} : vector<64x192xf32> to vector<64x16xf32>
    %31 = vector.extract_strided_slice %28 {offsets = [0, 32], sizes = [64, 16], strides = [1, 1]} : vector<64x192xf32> to vector<64x16xf32>
    %32 = vector.extract_strided_slice %28 {offsets = [0, 48], sizes = [64, 16], strides = [1, 1]} : vector<64x192xf32> to vector<64x16xf32>
    %33 = vector.shape_cast %29 : vector<64x16xf32> to vector<1x64x16xf32>
    %34 = vector.shape_cast %30 : vector<64x16xf32> to vector<1x64x16xf32>
    %35 = vector.shape_cast %31 : vector<64x16xf32> to vector<1x64x16xf32>
    %36 = vector.shape_cast %32 : vector<64x16xf32> to vector<1x64x16xf32>
    %37 = tpu.concatenate %33, %34, %35, %36 in 0 : vector<1x64x16xf32>, vector<1x64x16xf32>, vector<1x64x16xf32>, vector<1x64x16xf32> -> vector<4x64x16xf32>
    %38 = arith.truncf %37 : vector<4x64x16xf32> to vector<4x64x16xbf16>
    %39 = vector.extract_strided_slice %28 {offsets = [0, 64], sizes = [64, 16], strides = [1, 1]} : vector<64x192xf32> to vector<64x16xf32>
    %40 = vector.extract_strided_slice %28 {offsets = [0, 80], sizes = [64, 16], strides = [1, 1]} : vector<64x192xf32> to vector<64x16xf32>
    %41 = vector.extract_strided_slice %28 {offsets = [0, 96], sizes = [64, 16], strides = [1, 1]} : vector<64x192xf32> to vector<64x16xf32>
    %42 = vector.extract_strided_slice %28 {offsets = [0, 112], sizes = [64, 16], strides = [1, 1]} : vector<64x192xf32> to vector<64x16xf32>
    %43 = vector.shape_cast %39 : vector<64x16xf32> to vector<1x64x16xf32>
    %44 = vector.shape_cast %40 : vector<64x16xf32> to vector<1x64x16xf32>
    %45 = vector.shape_cast %41 : vector<64x16xf32> to vector<1x64x16xf32>
    %46 = vector.shape_cast %42 : vector<64x16xf32> to vector<1x64x16xf32>
    %47 = tpu.concatenate %43, %44, %45, %46 in 0 : vector<1x64x16xf32>, vector<1x64x16xf32>, vector<1x64x16xf32>, vector<1x64x16xf32> -> vector<4x64x16xf32>
    %48 = arith.truncf %47 : vector<4x64x16xf32> to vector<4x64x16xbf16>
    %49 = vector.extract_strided_slice %28 {offsets = [0, 128], sizes = [64, 16], strides = [1, 1]} : vector<64x192xf32> to vector<64x16xf32>
    %50 = vector.extract_strided_slice %28 {offsets = [0, 144], sizes = [64, 16], strides = [1, 1]} : vector<64x192xf32> to vector<64x16xf32>
    %51 = vector.extract_strided_slice %28 {offsets = [0, 160], sizes = [64, 16], strides = [1, 1]} : vector<64x192xf32> to vector<64x16xf32>
    %52 = vector.extract_strided_slice %28 {offsets = [0, 176], sizes = [64, 16], strides = [1, 1]} : vector<64x192xf32> to vector<64x16xf32>
    %53 = vector.shape_cast %49 : vector<64x16xf32> to vector<1x64x16xf32>
    %54 = vector.shape_cast %50 : vector<64x16xf32> to vector<1x64x16xf32>
    %55 = vector.shape_cast %51 : vector<64x16xf32> to vector<1x64x16xf32>
    %56 = vector.shape_cast %52 : vector<64x16xf32> to vector<1x64x16xf32>
    %57 = tpu.concatenate %53, %54, %55, %56 in 0 : vector<1x64x16xf32>, vector<1x64x16xf32>, vector<1x64x16xf32>, vector<1x64x16xf32> -> vector<4x64x16xf32>
    %58 = arith.truncf %57 : vector<4x64x16xf32> to vector<4x64x16xbf16>
    "tpu.trace_start"() <{level = 10 : i32, message = "hqe,hke->hqk"}> : () -> ()
    %cst_13 = arith.constant dense<0.000000e+00> : vector<4x64x64xf32>
    %59 = tpu.matmul %38, %48, %cst_13 {dimension_numbers = #tpu.dot_dimension_numbers<[2], [2], [1], [1], [0, 0, 0, 1, 1, 1], [0], [0]>} : vector<4x64x16xbf16>, vector<4x64x16xbf16>, vector<4x64x64xf32> -> vector<4x64x64xf32>
    "tpu.trace_stop"() : () -> ()
    %cst_14 = arith.constant dense<0xFF800000> : vector<4x64xf32>
    %60 = vector.multi_reduction <maximumf>, %59, %cst_14 [2] : vector<4x64x64xf32> to vector<4x64xf32>
    %61 = vector.shape_cast %60 : vector<4x64xf32> to vector<4x64x1xf32>
    %62 = vector.broadcast %61 : vector<4x64x1xf32> to vector<4x64x64xf32>
    %63 = arith.subf %59, %62 : vector<4x64x64xf32>
    %64 = math.exp %63 : vector<4x64x64xf32>
    %cst_15 = arith.constant dense<0.000000e+00> : vector<4x64xf32>
    %65 = vector.multi_reduction <add>, %64, %cst_15 [2] : vector<4x64x64xf32> to vector<4x64xf32>
    %66 = vector.shape_cast %65 : vector<4x64xf32> to vector<4x64x1xf32>
    %67 = tpu.reciprocal %66 {approx = true} : vector<4x64x1xf32> -> vector<4x64x1xf32>
    %68 = vector.broadcast %67 : vector<4x64x1xf32> to vector<4x64x64xf32>
    %69 = arith.mulf %64, %68 : vector<4x64x64xf32>
    %70 = arith.truncf %69 : vector<4x64x64xf32> to vector<4x64x64xbf16>
    "tpu.trace_start"() <{level = 10 : i32, message = "hqk,hke->hqe"}> : () -> ()
    %cst_16 = arith.constant dense<0.000000e+00> : vector<4x64x16xf32>
    %71 = tpu.matmul %70, %58, %cst_16 {dimension_numbers = #tpu.dot_dimension_numbers<[2], [1], [1], [2], [0, 0, 0, 1, 1, 2], [0], [0]>} : vector<4x64x64xbf16>, vector<4x64x16xbf16>, vector<4x64x16xf32> -> vector<4x64x16xf32>
    "tpu.trace_stop"() : () -> ()
    %72 = vector.extract_strided_slice %71 {offsets = [0, 0, 0], sizes = [1, 64, 16], strides = [1, 1, 1]} : vector<4x64x16xf32> to vector<1x64x16xf32>
    %73 = vector.shape_cast %72 : vector<1x64x16xf32> to vector<64x16xf32>
    %74 = vector.extract_strided_slice %71 {offsets = [1, 0, 0], sizes = [1, 64, 16], strides = [1, 1, 1]} : vector<4x64x16xf32> to vector<1x64x16xf32>
    %75 = vector.shape_cast %74 : vector<1x64x16xf32> to vector<64x16xf32>
    %76 = vector.extract_strided_slice %71 {offsets = [2, 0, 0], sizes = [1, 64, 16], strides = [1, 1, 1]} : vector<4x64x16xf32> to vector<1x64x16xf32>
    %77 = vector.shape_cast %76 : vector<1x64x16xf32> to vector<64x16xf32>
    %78 = vector.extract_strided_slice %71 {offsets = [3, 0, 0], sizes = [1, 64, 16], strides = [1, 1, 1]} : vector<4x64x16xf32> to vector<1x64x16xf32>
    %79 = vector.shape_cast %78 : vector<1x64x16xf32> to vector<64x16xf32>
    %80 = tpu.concatenate %73, %75, %77, %79 in 1 : vector<64x16xf32>, vector<64x16xf32>, vector<64x16xf32>, vector<64x16xf32> -> vector<64x64xf32>
    %81 = arith.truncf %80 : vector<64x64xf32> to vector<64x64xbf16>
    %c0_17 = arith.constant 0 : index
    %c0_18 = arith.constant 0 : index
    %82 = vector.load %arg5[%c0_17, %c0_18] : memref<64x32xbf16, #tpu.memory_space<vmem>>, vector<64x32xbf16>
    %cst_19 = arith.constant dense<0.000000e+00> : vector<64x32xf32>
    %83 = tpu.matmul %81, %82, %cst_19 {dimension_numbers = #tpu.dot_dimension_numbers<[1], [0], [0], [1], [0, 0, 1, 1], [], []>} : vector<64x64xbf16>, vector<64x32xbf16>, vector<64x32xf32> -> vector<64x32xf32>
    %c0_20 = arith.constant 0 : index
    %c0_21 = arith.constant 0 : index
    %c0_22 = arith.constant 0 : index
    %84 = vector.load %arg6[%c0_20, %c0_21, %c0_22] : memref<1x64x32xf32, #tpu.memory_space<vmem>>, vector<1x64x32xf32>
    %85 = vector.shape_cast %84 : vector<1x64x32xf32> to vector<64x32xf32>
    %86 = vector.shape_cast %83 : vector<64x32xf32> to vector<1x64x32xf32>
    tpu.vector_store %arg6[%c0_20, %c0_21, %c0_22], %86 {strides = array<i32>} : memref<1x64x32xf32, #tpu.memory_space<vmem>>, vector<1x64x32xf32>,
    return
  }
  func.func @transform_0(%arg0: i32) -> (i32, i32, i32) {
    %c0_i32 = arith.constant 0 : i32
    %c0_i32_0 = arith.constant 0 : i32
    %c0_i32_1 = arith.constant 0 : i32
    return %arg0, %c0_i32, %c0_i32_0 : i32, i32, i32
  }
  func.func @transform_1(%arg0: i32) -> (i32, i32) {
    %c0_i32 = arith.constant 0 : i32
    %c0_i32_0 = arith.constant 0 : i32
    %c0_i32_1 = arith.constant 0 : i32
    return %c0_i32, %c0_i32_0 : i32, i32
  }
  func.func @transform_2(%arg0: i32) -> (i32, i32) {
    %c0_i32 = arith.constant 0 : i32
    %c0_i32_0 = arith.constant 0 : i32
    %c0_i32_1 = arith.constant 0 : i32
    return %c0_i32, %c0_i32_0 : i32, i32
  }
  func.func @transform_3(%arg0: i32) -> (i32, i32) {
    %c0_i32 = arith.constant 0 : i32
    %c0_i32_0 = arith.constant 0 : i32
    %c0_i32_1 = arith.constant 0 : i32
    return %c0_i32, %c0_i32_0 : i32, i32
  }
  func.func @transform_4(%arg0: i32) -> (i32, i32) {
    %c0_i32 = arith.constant 0 : i32
    %c0_i32_0 = arith.constant 0 : i32
    %c0_i32_1 = arith.constant 0 : i32
    return %c0_i32, %c0_i32_0 : i32, i32
  }
  func.func @transform_5(%arg0: i32) -> (i32, i32, i32) {
    %c0_i32 = arith.constant 0 : i32
    %c0_i32_0 = arith.constant 0 : i32
    %c0_i32_1 = arith.constant 0 : i32
    return %arg0, %c0_i32, %c0_i32_0 : i32, i32, i32
  }
}

</mosaic_0001>

<llo_original>
// kernel: attention_forward.1
$region0: #{attention_forward.1}
  #allocation0 [shape = 'u32[]', space=smem, size = 0x4, offset = 0x4, fixed_abs, tag = 'smem constant byte address 0x4 - core index']
  #allocation1 [shape = 'u32[144,128]{1,0:T(1,128)}', space=vmem, size = 0x12000, scoped, tag = 'internal scratch']
  %s0 = inlined_call_operand.vmem [shape: f32[2,64,32], index: 0, kind: input, shape index: {}]
  %s1 = inlined_call_operand.vmem [shape: f32[1,32], index: 1, kind: input, shape index: {}]
  %s2 = inlined_call_operand.vmem [shape: f32[1,32], index: 2, kind: input, shape index: {}]
  %s3 = inlined_call_operand.vmem [shape: bf16[32,192], index: 3, kind: input, shape index: {}]
  %s4 = inlined_call_operand.vmem [shape: bf16[64,32], index: 4, kind: input, shape index: {}]
  %s5 = inlined_call_operand.vmem [shape: f32[2,64,32], index: 5, kind: output, shape index: {}]
  %s6 = sld [smem:[#allocation0]]
  $region53: #{attention_forward.1} parent=0
    _
  %s8 = ssub.s32 1, %s6
  %s9 = scalar_select 0, %s8, %s6
  loop: start=0, step=1, limit=4
  $region2: #{attention_forward.1} parent=0 // loop_pre_header
    _
  $region3: #{attention_forward.1} parent=0 // loop_header
    %s11 = sphi 0, %s15
    %p12 = scmp.ge.s32.totalorder %s11, 4
    %s21 = sphi 0, %s23
    %s24 = sphi 0, %s21
    %s25 = sphi 0, %s24
    %s41 = sphi 0, %s25
    %s45 = sphi 0, %s45
    %s47 = sphi 0, %s45
    %s48 = sphi 0, %s47
    %s62 = sphi 0, %s48
    %s66 = sphi 0, %s66
    %s68 = sphi 0, %s66
    %s69 = sphi 0, %s68
    %s83 = sphi 0, %s69
    %s87 = sphi 0, %s87
    %s89 = sphi 0, %s87
    %s90 = sphi 0, %s89
    %s104 = sphi 0, %s90
    %s108 = sphi 0, %s108
    %s110 = sphi 0, %s108
    %s111 = sphi 0, %s110
    %s125 = sphi 0, %s111
    %s131 = sphi 0, %s133
    %s134 = sphi 0, %s131
    %s135 = sphi 0, %s134
    %s151 = sphi 0, %s135
  $region4: #{attention_forward.1} parent=0 // loop_header_branch
    %14 = sbr.rel (%p12) target = $region8
  $region5: #{attention_forward.1} parent=0 // loop_body
    %s16 = ssub.s32 %s11, 1
    %s17 = ssub.s32 %s11, 2
    %s18 = sadd.s32 %s11, 1
    %s19 = ssub.s32 %s11, %s18
    %p20 = scmp.eq.s32.totalorder %s19, 0
    %s22 = sadd.s32 %s21, 1
    %s23 = scalar_select %p20, %s21, %s22
    %p26 = pneg %p20
    %p27 = scmp.eq.s32.totalorder %s11, 1
    %p28 = por %p26, %p27
    %p29 = scmp.ne.s32.totalorder %s21, %s24
    %p30 = scmp.eq.s32.totalorder %s11, 0
    %p31 = por %p29, %p30
    %p32 = scmp.ne.s32.totalorder %s21, %s24
    %p33 = scmp.eq.s32.totalorder %s16, 1
    %p34 = por %p32, %p33
    %p35 = scmp.ne.s32.totalorder %s24, %s25
    %p36 = scmp.eq.s32.totalorder %s16, 0
    %p37 = por %p35, %p36
    %p38 = scmp.ne.s32.totalorder %s24, %s25
    %p39 = scmp.eq.s32.totalorder %s17, 1
    %p40 = por %p38, %p39
    %p42 = scmp.ne.s32.totalorder %s25, %s41
    %p43 = scmp.eq.s32.totalorder %s17, 0
    %p44 = por %p42, %p43
    %s46 = sadd.s32 %s45, 1
    %p49 = scmp.eq.s32.totalorder %s11, 1
    %p50 = scmp.ne.s32.totalorder %s45, %s47
    %p51 = scmp.eq.s32.totalorder %s11, 0
    %p52 = por %p50, %p51
    %p53 = scmp.ne.s32.totalorder %s45, %s47
    %p54 = scmp.eq.s32.totalorder %s16, 1
    %p55 = por %p53, %p54
    %p56 = scmp.ne.s32.totalorder %s47, %s48
    %p57 = scmp.eq.s32.totalorder %s16, 0
    %p58 = por %p56, %p57
    %p59 = scmp.ne.s32.totalorder %s47, %s48
    %p60 = scmp.eq.s32.totalorder %s17, 1
    %p61 = por %p59, %p60
    %p63 = scmp.ne.s32.totalorder %s48, %s62
    %p64 = scmp.eq.s32.totalorder %s17, 0
    %p65 = por %p63, %p64
    %s67 = sadd.s32 %s66, 1
    %p70 = scmp.eq.s32.totalorder %s11, 1
    %p71 = scmp.ne.s32.totalorder %s66, %s68
    %p72 = scmp.eq.s32.totalorder %s11, 0
    %p73 = por %p71, %p72
    %p74 = scmp.ne.s32.totalorder %s66, %s68
    %p75 = scmp.eq.s32.totalorder %s16, 1
    %p76 = por %p74, %p75
    %p77 = scmp.ne.s32.totalorder %s68, %s69
    %p78 = scmp.eq.s32.totalorder %s16, 0
    %p79 = por %p77, %p78
    %p80 = scmp.ne.s32.totalorder %s68, %s69
    %p81 = scmp.eq.s32.totalorder %s17, 1
    %p82 = por %p80, %p81
    %p84 = scmp.ne.s32.totalorder %s69, %s83
    %p85 = scmp.eq.s32.totalorder %s17, 0
    %p86 = por %p84, %p85
    %s88 = sadd.s32 %s87, 1
    %p91 = scmp.eq.s32.totalorder %s11, 1
    %p92 = scmp.ne.s32.totalorder %s87, %s89
    %p93 = scmp.eq.s32.totalorder %s11, 0
    %p94 = por %p92, %p93
    %p95 = scmp.ne.s32.totalorder %s87, %s89
    %p96 = scmp.eq.s32.totalorder %s16, 1
    %p97 = por %p95, %p96
    %p98 = scmp.ne.s32.totalorder %s89, %s90
    %p99 = scmp.eq.s32.totalorder %s16, 0
    %p100 = por %p98, %p99
    %p101 = scmp.ne.s32.totalorder %s89, %s90
    %p102 = scmp.eq.s32.totalorder %s17, 1
    %p103 = por %p101, %p102
    %p105 = scmp.ne.s32.totalorder %s90, %s104
    %p106 = scmp.eq.s32.totalorder %s17, 0
    %p107 = por %p105, %p106
    %s109 = sadd.s32 %s108, 1
    %p112 = scmp.eq.s32.totalorder %s11, 1
    %p113 = scmp.ne.s32.totalorder %s108, %s110
    %p114 = scmp.eq.s32.totalorder %s11, 0
    %p115 = por %p113, %p114
    %p116 = scmp.ne.s32.totalorder %s108, %s110
    %p117 = scmp.eq.s32.totalorder %s16, 1
    %p118 = por %p116, %p117
    %p119 = scmp.ne.s32.totalorder %s110, %s111
    %p120 = scmp.eq.s32.totalorder %s16, 0
    %p121 = por %p119, %p120
    %p122 = scmp.ne.s32.totalorder %s110, %s111
    %p123 = scmp.eq.s32.totalorder %s17, 1
    %p124 = por %p122, %p123
    %p126 = scmp.ne.s32.totalorder %s111, %s125
    %p127 = scmp.eq.s32.totalorder %s17, 0
    %p128 = por %p126, %p127
    %s129 = ssub.s32 %s11, %s18
    %p130 = scmp.eq.s32.totalorder %s129, 0
    %s132 = sadd.s32 %s131, 1
    %s133 = scalar_select %p130, %s131, %s132
    %p136 = pneg %p130
    %p137 = scmp.eq.s32.totalorder %s11, 1
    %p138 = por %p136, %p137
    %p139 = scmp.ne.s32.totalorder %s131, %s134
    %p140 = scmp.eq.s32.totalorder %s11, 0
    %p141 = por %p139, %p140
    %p142 = scmp.ne.s32.totalorder %s131, %s134
    %p143 = scmp.eq.s32.totalorder %s16, 1
    %p144 = por %p142, %p143
    %p145 = scmp.ne.s32.totalorder %s134, %s135
    %p146 = scmp.eq.s32.totalorder %s16, 0
    %p147 = por %p145, %p146
    %p148 = scmp.ne.s32.totalorder %s134, %s135
    %p149 = scmp.eq.s32.totalorder %s17, 1
    %p150 = por %p148, %p149
    %p152 = scmp.ne.s32.totalorder %s135, %s151
    %p153 = scmp.eq.s32.totalorder %s17, 0
    %p154 = por %p152, %p153
    %p155 = scmp.le.s32.totalorder 1, %s11
    %p156 = scmp.lt.s32.totalorder %s11, 3
    %p157 = pnand %p155, %p156
    %p158 = pneg %p157
    // Predicated region
    $region9: #{attention_forward.1} parent=5 // pred_check
      _
    $region10: #{attention_forward.1} parent=5 // pred_check_branch
      %160 = sbr.rel (%p157) target = $region12
    $region11: #{attention_forward.1} parent=5 // pred_region
      %s161 = ssub.s32 %s11, 1
      // Predicated region
      $region13: #{attention_forward.1} parent=11 // pred_check
        %p162 = pneg %p58
      $region14: #{attention_forward.1} parent=11 // pred_check_branch
        %164 = sbr.rel (%p162) target = $region16
      $region15: #{attention_forward.1} parent=11 // pred_region
        _
      $region16: #{attention_forward.1} parent=11 // pred_fallthru
        _
      // Predicated region
      $region17: #{attention_forward.1} parent=11 // pred_check
        %p165 = pneg %p79
      $region18: #{attention_forward.1} parent=11 // pred_check_branch
        %167 = sbr.rel (%p165) target = $region20
      $region19: #{attention_forward.1} parent=11 // pred_region
        _
      $region20: #{attention_forward.1} parent=11 // pred_fallthru
        _
      // Predicated region
      $region21: #{attention_forward.1} parent=11 // pred_check
        %p168 = pneg %p100
      $region22: #{attention_forward.1} parent=11 // pred_check_branch
        %170 = sbr.rel (%p168) target = $region24
      $region23: #{attention_forward.1} parent=11 // pred_region
        _
      $region24: #{attention_forward.1} parent=11 // pred_fallthru
        _
      // Predicated region
      $region25: #{attention_forward.1} parent=11 // pred_check
        %p171 = pneg %p121
      $region26: #{attention_forward.1} parent=11 // pred_check_branch
        %173 = sbr.rel (%p171) target = $region28
      $region27: #{attention_forward.1} parent=11 // pred_region
        _
      $region28: #{attention_forward.1} parent=11 // pred_fallthru
        _
    $region12: #{attention_forward.1} parent=5 // pred_fallthru
      _
    %p174 = scmp.lt.s32.totalorder %s11, 2
    // Predicated region
    $region29: #{attention_forward.1} parent=5 // pred_check
      %p175 = pneg %p174
    $region30: #{attention_forward.1} parent=5 // pred_check_branch
      %177 = sbr.rel (%p175) target = $region32
    $region31: #{attention_forward.1} parent=5 // pred_region
      // Predicated region
      $region33: #{attention_forward.1} parent=31 // pred_check
        %p178 = pneg %p31
      $region34: #{attention_forward.1} parent=31 // pred_check_branch
        %180 = sbr.rel (%p178) target = $region36
      $region35: #{attention_forward.1} parent=31 // pred_region
        %p181 = scmp.lt.s32.totalorder %s11, 1
        %s182 = scalar_select %p181, %s11, 1
        %s183 = smul.addr %s182, 8
        %s184 = smul.addr %s183, 8
        %s185 = scalar_lea.vmem %s0, %s184
      $region36: #{attention_forward.1} parent=31 // pred_fallthru
        _
    $region32: #{attention_forward.1} parent=5 // pred_fallthru
      _
    %p186 = scmp.le.s32.totalorder 1, %s11
    %p187 = scmp.lt.s32.totalorder %s11, 3
    %p188 = pnand %p186, %p187
    %p189 = pneg %p188
    // Predicated region
    $region37: #{attention_forward.1} parent=5 // pred_check
      _
    $region38: #{attention_forward.1} parent=5 // pred_check_branch
      %191 = sbr.rel (%p188) target = $region40
    $region39: #{attention_forward.1} parent=5 // pred_region
      %s192 = ssub.s32 %s11, 1
      %p193 = scmp.lt.s32.totalorder %s16, 1
      %s194 = scalar_select %p193, %s16, 1
      %s195 = smul.addr %s194, 8
      %s196 = smul.addr %s195, 8
      %s197 = scalar_lea.vmem %s0, %s196
      %p198 = pneg %p37
      %p199 = pneg %p34
      %p200 = pneg %p58
      %p201 = pneg %p55
      %p202 = pneg %p79
      %p203 = pneg %p76
      %p204 = pneg %p100
      %p205 = pneg %p97
      %p206 = pneg %p121
      %p207 = pneg %p118
      %p208 = pneg %p147
      %p209 = pneg %p144
      %p210 = scmp.lt.s32.totalorder %s16, 1
      %s211 = scalar_select %p210, %s16, 1
      %s212 = smul.addr %s211, 8
      %s213 = smul.addr %s212, 8
      %s214 = scalar_lea.vmem %s5, %s213
      %p215 = scmp.lt.s32.totalorder %s16, 1
      %s216 = scalar_select %p215, %s16, 1
      %s217 = smul.addr %s216, 8
      %s218 = smul.addr %s217, 8
      %s219 = scalar_lea.vmem %s0, %s218
      %p220 = scmp.lt.s32.totalorder %s16, 1
      %s221 = scalar_select %p220, %s16, 1
      %s222 = smul.addr %s221, 8
      %s223 = smul.addr %s222, 8
      %s224 = scalar_lea.vmem %s5, %s223
      %v226 = vld [vmem:[%s219] sm:$0xff]
      %v227 = vld [vmem:[%s219 + $0x8] sm:$0xff]
      %v228 = vld [vmem:[%s219 + $0x10] sm:$0xff]
      %v229 = vld [vmem:[%s219 + $0x18] sm:$0xff]
      %v230 = vld [vmem:[%s219 + $0x20] sm:$0xff]
      %v231 = vld [vmem:[%s219 + $0x28] sm:$0xff]
      %v232 = vld [vmem:[%s219 + $0x30] sm:$0xff]
      %v233 = vld [vmem:[%s219 + $0x38] sm:$0xff]
      %vm234 = vcmask 261120
      %v235 = vsel %vm234, %v226, 0.0
      %236 = vadd.xlane.f32.xlu0 %v235
      %v237 = vpop.xlane.xlu0 %236
      %v238 = vsel %vm234, %v227, 0.0
      %239 = vadd.xlane.f32.xlu0 %v238
      %v240 = vpop.xlane.xlu0 %239
      %v241 = vsel %vm234, %v228, 0.0
      %242 = vadd.xlane.f32.xlu0 %v241
      %v243 = vpop.xlane.xlu0 %242
      %v244 = vsel %vm234, %v229, 0.0
      %245 = vadd.xlane.f32.xlu0 %v244
      %v246 = vpop.xlane.xlu0 %245
      %v247 = vsel %vm234, %v230, 0.0
      %248 = vadd.xlane.f32.xlu0 %v247
      %v249 = vpop.xlane.xlu0 %248
      %v250 = vsel %vm234, %v231, 0.0
      %251 = vadd.xlane.f32.xlu0 %v250
      %v252 = vpop.xlane.xlu0 %251
      %v253 = vsel %vm234, %v232, 0.0
      %254 = vadd.xlane.f32.xlu0 %v253
      %v255 = vpop.xlane.xlu0 %254
      %v256 = vsel %vm234, %v233, 0.0
      %257 = vadd.xlane.f32.xlu0 %v256
      %v258 = vpop.xlane.xlu0 %257
      %v259 = vrcp.pop 32.0
      %v260 = vmul.f32 %v237, %v259
      %v261 = vmul.f32 %v240, %v259
      %v262 = vmul.f32 %v243, %v259
      %v263 = vmul.f32 %v246, %v259
      %v264 = vmul.f32 %v249, %v259
      %v265 = vmul.f32 %v252, %v259
      %v266 = vmul.f32 %v255, %v259
      %v267 = vmul.f32 %v258, %v259
      %v268 = vsub.f32 %v226, %v260
      %v269 = vsub.f32 %v227, %v261
      %v270 = vsub.f32 %v228, %v262
      %v271 = vsub.f32 %v229, %v263
      %v272 = vsub.f32 %v230, %v264
      %v273 = vsub.f32 %v231, %v265
      %v274 = vsub.f32 %v232, %v266
      %v275 = vsub.f32 %v233, %v267
      %v276 = vmul.f32 %v268, %v268
      %v277 = vmul.f32 %v269, %v269
      %v278 = vmul.f32 %v270, %v270
      %v279 = vmul.f32 %v271, %v271
      %v280 = vmul.f32 %v272, %v272
      %v281 = vmul.f32 %v273, %v273
      %v282 = vmul.f32 %v274, %v274
      %v283 = vmul.f32 %v275, %v275
      %v284 = vsel %vm234, %v276, 0.0
      %285 = vadd.xlane.f32.xlu0 %v284
      %v286 = vpop.xlane.xlu0 %285
      %v287 = vsel %vm234, %v277, 0.0
      %288 = vadd.xlane.f32.xlu0 %v287
      %v289 = vpop.xlane.xlu0 %288
      %v290 = vsel %vm234, %v278, 0.0
      %291 = vadd.xlane.f32.xlu0 %v290
      %v292 = vpop.xlane.xlu0 %291
      %v293 = vsel %vm234, %v279, 0.0
      %294 = vadd.xlane.f32.xlu0 %v293
      %v295 = vpop.xlane.xlu0 %294
      %v296 = vsel %vm234, %v280, 0.0
      %297 = vadd.xlane.f32.xlu0 %v296
      %v298 = vpop.xlane.xlu0 %297
      %v299 = vsel %vm234, %v281, 0.0
      %300 = vadd.xlane.f32.xlu0 %v299
      %v301 = vpop.xlane.xlu0 %300
      %v302 = vsel %vm234, %v282, 0.0
      %303 = vadd.xlane.f32.xlu0 %v302
      %v304 = vpop.xlane.xlu0 %303
      %v305 = vsel %vm234, %v283, 0.0
      %306 = vadd.xlane.f32.xlu0 %v305
      %v307 = vpop.xlane.xlu0 %306
      %v308 = vmul.f32 %v286, %v259
      %v309 = vmul.f32 %v289, %v259
      %v310 = vmul.f32 %v292, %v259
      %v311 = vmul.f32 %v295, %v259
      %v312 = vmul.f32 %v298, %v259
      %v313 = vmul.f32 %v301, %v259
      %v314 = vmul.f32 %v304, %v259
      %v315 = vmul.f32 %v307, %v259
      %v316 = vadd.f32 %v308, 1e-05
      %v317 = vadd.f32 %v309, 1e-05
      %v318 = vadd.f32 %v310, 1e-05
      %v319 = vadd.f32 %v311, 1e-05
      %v320 = vadd.f32 %v312, 1e-05
      %v321 = vadd.f32 %v313, 1e-05
      %v322 = vadd.f32 %v314, 1e-05
      %v323 = vadd.f32 %v315, 1e-05
      %v324 = vrsqrt.pop %v316
      %v325 = vrsqrt.pop %v317
      %v326 = vrsqrt.pop %v318
      %v327 = vrsqrt.pop %v319
      %v328 = vrsqrt.pop %v320
      %v329 = vrsqrt.pop %v321
      %v330 = vrsqrt.pop %v322
      %v331 = vrsqrt.pop %v323
      %v332 = vmul.f32 %v268, %v324
      %v333 = vmul.f32 %v269, %v325
      %v334 = vmul.f32 %v270, %v326
      %v335 = vmul.f32 %v271, %v327
      %v336 = vmul.f32 %v272, %v328
      %v337 = vmul.f32 %v273, %v329
      %v338 = vmul.f32 %v274, %v330
      %v339 = vmul.f32 %v275, %v331
      %v340 = vld [vmem:[%s1] sm:$0x1]
      %v342 = vlaneseq
      %v343 = vshrl.u32 %v342, 7
      %v344 = vsub.s32 0, %v343
      %v345 = vrot.slane %v340, %v344
      %v347 = vmul.f32 %v332, %v345
      %v348 = vmul.f32 %v333, %v345
      %v349 = vmul.f32 %v334, %v345
      %v350 = vmul.f32 %v335, %v345
      %v351 = vmul.f32 %v336, %v345
      %v352 = vmul.f32 %v337, %v345
      %v353 = vmul.f32 %v338, %v345
      %v354 = vmul.f32 %v339, %v345
      %v355 = vld [vmem:[%s2] sm:$0x1]
      %v357 = vlaneseq
      %v358 = vshrl.u32 %v357, 7
      %v359 = vsub.s32 0, %v358
      %v360 = vrot.slane %v355, %v359
      %v362 = vadd.f32 %v347, %v360
      %v363 = vadd.f32 %v348, %v360
      %v364 = vadd.f32 %v349, %v360
      %v365 = vadd.f32 %v350, %v360
      %v366 = vadd.f32 %v351, %v360
      %v367 = vadd.f32 %v352, %v360
      %v368 = vadd.f32 %v353, %v360
      %v369 = vadd.f32 %v354, %v360
      %v370 = vpack.c.bf16 %v363, %v362
      %v371 = vpack.c.bf16 %v365, %v364
      %v372 = vpack.c.bf16 %v367, %v366
      %v373 = vpack.c.bf16 %v369, %v368
      %v374 = vld [vmem:[%s3] sm:$0xff]
      %v375 = vld [vmem:[%s3 + $0x8] sm:$0xff]
      %v376 = vld [vmem:[%s3 + $0x10] sm:$0xff]
      %v377 = vld [vmem:[%s3 + $0x18] sm:$0xff]
      %v382 = vunpack.c.l.b16 %v374
      %v383 = vunpack.c.h.b16 %v374
      %v384 = vunpack.c.l.b16 %v375
      %v385 = vunpack.c.h.b16 %v375
      %v386 = vunpack.c.l.b16 %v376
      %v387 = vunpack.c.h.b16 %v376
      %v388 = vunpack.c.l.b16 %v377
      %v389 = vunpack.c.h.b16 %v377
      %v390 = vpack.c.b16 %v384, %v382
      %v391 = vpack.c.b16 %v385, %v383
      %v392 = vpack.c.b16 %v388, %v386
      %v393 = vpack.c.b16 %v389, %v387
      %v399 = vsel %vm234, %v370, 0
      %v402 = vsel %vm234, %v371, 0
      %v405 = vsel %vm234, %v372, 0
      %v408 = vsel %vm234, %v373, 0
      %410 = vmatprep.subr.bf16.mxu0 %v391
      %411 = vmatpush1.bf16.msra.mxu0 %v390
      %412 = vmatprep.subr.bf16.mxu0 %v393
      %413 = vmatpush1.bf16.msra.mxu0 %v392
      %414 = vmatprep.subr.bf16.mxu0 0
      %415 = vmatpush1.bf16.msra.mxu0 0
      %416 = vmatprep.subr.bf16.mxu0 0
      %417 = vmatpush1.bf16.msra.mxu0 0
      %418 = vmatprep.subr.bf16.mxu0 0
      %419 = vmatpush1.bf16.msra.mxu0 0
      %420 = vmatprep.subr.bf16.mxu0 0
      %421 = vmatpush1.bf16.msra.mxu0 0
      %422 = vmatprep.subr.bf16.mxu0 0
      %423 = vmatpush1.bf16.msra.mxu0 0
      %424 = vmatprep.subr.bf16.mxu0 0
      %425 = vmatpush1.bf16.msra.mxu0 0
      %426 = vmatprep.subr.bf16.mxu0 0
      %427 = vmatpush1.bf16.msra.mxu0 0
      %428 = vmatprep.subr.bf16.mxu0 0
      %429 = vmatpush1.bf16.msra.mxu0 0
      %430 = vmatprep.subr.bf16.mxu0 0
      %431 = vmatpush1.bf16.msra.mxu0 0
      %432 = vmatprep.subr.bf16.mxu0 0
      %433 = vmatpush1.bf16.msra.mxu0 0
      %434 = vmatprep.subr.bf16.mxu0 0
      %435 = vmatpush1.bf16.msra.mxu0 0
      %436 = vmatprep.subr.bf16.mxu0 0
      %437 = vmatpush1.bf16.msra.mxu0 0
      %438 = vmatprep.subr.bf16.mxu0 0
      %439 = vmatpush1.bf16.msra.mxu0 0
      %440 = vmatprep.subr.bf16.mxu0 0
      %441 = vmatpush1.bf16.msra.mxu0 0
      %442 = vmatprep.mubr.bf16.mxu0 0
      %443 = vmatmul.mubr.bf16.gmra.mrb[0].mxu0 %v399
      %v444 = vpop.f32.mrb[0].mxu0
      %v445 = vadd.f32 0.0, %v444
      %v446 = vpop.f32.mrb[0].mxu0
      %v447 = vadd.f32 0.0, %v446
      %v448 = vpop.f32.mrb[0].mxu0
      %v449 = vadd.f32 0.0, %v448
      %v450 = vpop.f32.mrb[0].mxu0
      %v451 = vadd.f32 0.0, %v450
      %452 = vmatprep.mubr.bf16.mxu0 0
      %453 = vmatmul.mubr.bf16.gmra.mrb[0].mxu0 %v402
      %v454 = vpop.f32.mrb[0].mxu0
      %v455 = vadd.f32 0.0, %v454
      %v456 = vpop.f32.mrb[0].mxu0
      %v457 = vadd.f32 0.0, %v456
      %v458 = vpop.f32.mrb[0].mxu0
      %v459 = vadd.f32 0.0, %v458
      %v460 = vpop.f32.mrb[0].mxu0
      %v461 = vadd.f32 0.0, %v460
      %462 = vmatprep.mubr.bf16.mxu0 0
      %463 = vmatmul.mubr.bf16.gmra.mrb[0].mxu0 %v405
      %v464 = vpop.f32.mrb[0].mxu0
      %v465 = vadd.f32 0.0, %v464
      %v466 = vpop.f32.mrb[0].mxu0
      %v467 = vadd.f32 0.0, %v466
      %v468 = vpop.f32.mrb[0].mxu0
      %v469 = vadd.f32 0.0, %v468
      %v470 = vpop.f32.mrb[0].mxu0
      %v471 = vadd.f32 0.0, %v470
      %472 = vmatprep.mubr.bf16.mxu0 0
      %473 = vmatmul.mubr.bf16.gmra.mrb[0].mxu0 %v408
      %v474 = vpop.f32.mrb[0].mxu0
      %v475 = vadd.f32 0.0, %v474
      %v476 = vpop.f32.mrb[0].mxu0
      %v477 = vadd.f32 0.0, %v476
      %v478 = vpop.f32.mrb[0].mxu0
      %v479 = vadd.f32 0.0, %v478
      %v480 = vpop.f32.mrb[0].mxu0
      %v481 = vadd.f32 0.0, %v480
      %482 = vdwg.mxu0
      %491 = vrot.lane.b32.xlu0 %v445, 112
      %v492 = vpop.permute.xlu0 %491
      %493 = vrot.lane.b32.xlu0 %v449, 112
      %v494 = vpop.permute.xlu0 %493
      %495 = vrot.lane.b32.xlu0 %v455, 112
      %v496 = vpop.permute.xlu0 %495
      %497 = vrot.lane.b32.xlu0 %v459, 112
      %v498 = vpop.permute.xlu0 %497
      %499 = vrot.lane.b32.xlu0 %v465, 112
      %v500 = vpop.permute.xlu0 %499
      %501 = vrot.lane.b32.xlu0 %v469, 112
      %v502 = vpop.permute.xlu0 %501
      %503 = vrot.lane.b32.xlu0 %v475, 112
      %v504 = vpop.permute.xlu0 %503
      %505 = vrot.lane.b32.xlu0 %v479, 112
      %v506 = vpop.permute.xlu0 %505
      %515 = vrot.lane.b32.xlu0 %v445, 96
      %v516 = vpop.permute.xlu0 %515
      %517 = vrot.lane.b32.xlu0 %v449, 96
      %v518 = vpop.permute.xlu0 %517
      %519 = vrot.lane.b32.xlu0 %v455, 96
      %v520 = vpop.permute.xlu0 %519
      %521 = vrot.lane.b32.xlu0 %v459, 96
      %v522 = vpop.permute.xlu0 %521
      %523 = vrot.lane.b32.xlu0 %v465, 96
      %v524 = vpop.permute.xlu0 %523
      %525 = vrot.lane.b32.xlu0 %v469, 96
      %v526 = vpop.permute.xlu0 %525
      %527 = vrot.lane.b32.xlu0 %v475, 96
      %v528 = vpop.permute.xlu0 %527
      %529 = vrot.lane.b32.xlu0 %v479, 96
      %v530 = vpop.permute.xlu0 %529
      %539 = vrot.lane.b32.xlu0 %v445, 80
      %v540 = vpop.permute.xlu0 %539
      %541 = vrot.lane.b32.xlu0 %v449, 80
      %v542 = vpop.permute.xlu0 %541
      %543 = vrot.lane.b32.xlu0 %v455, 80
      %v544 = vpop.permute.xlu0 %543
      %545 = vrot.lane.b32.xlu0 %v459, 80
      %v546 = vpop.permute.xlu0 %545
      %547 = vrot.lane.b32.xlu0 %v465, 80
      %v548 = vpop.permute.xlu0 %547
      %549 = vrot.lane.b32.xlu0 %v469, 80
      %v550 = vpop.permute.xlu0 %549
      %551 = vrot.lane.b32.xlu0 %v475, 80
      %v552 = vpop.permute.xlu0 %551
      %553 = vrot.lane.b32.xlu0 %v479, 80
      %v554 = vpop.permute.xlu0 %553
      %v563 = vpack.c.bf16 %v449, %v445
      %v564 = vpack.c.bf16 %v459, %v455
      %v565 = vpack.c.bf16 %v469, %v465
      %v566 = vpack.c.bf16 %v479, %v475
      %v567 = vpack.c.bf16 %v494, %v492
      %v568 = vpack.c.bf16 %v498, %v496
      %v569 = vpack.c.bf16 %v502, %v500
      %v570 = vpack.c.bf16 %v506, %v504
      %v571 = vpack.c.bf16 %v518, %v516
      %v572 = vpack.c.bf16 %v522, %v520
      %v573 = vpack.c.bf16 %v526, %v524
      %v574 = vpack.c.bf16 %v530, %v528
      %v575 = vpack.c.bf16 %v542, %v540
      %v576 = vpack.c.bf16 %v546, %v544
      %v577 = vpack.c.bf16 %v550, %v548
      %v578 = vpack.c.bf16 %v554, %v552
      %587 = vrot.lane.b32.xlu0 %v447, 112
      %v588 = vpop.permute.xlu0 %587
      %589 = vrot.lane.b32.xlu0 %v451, 112
      %v590 = vpop.permute.xlu0 %589
      %591 = vrot.lane.b32.xlu0 %v457, 112
      %v592 = vpop.permute.xlu0 %591
      %593 = vrot.lane.b32.xlu0 %v461, 112
      %v594 = vpop.permute.xlu0 %593
      %595 = vrot.lane.b32.xlu0 %v467, 112
      %v596 = vpop.permute.xlu0 %595
      %597 = vrot.lane.b32.xlu0 %v471, 112
      %v598 = vpop.permute.xlu0 %597
      %599 = vrot.lane.b32.xlu0 %v477, 112
      %v600 = vpop.permute.xlu0 %599
      %601 = vrot.lane.b32.xlu0 %v481, 112
      %v602 = vpop.permute.xlu0 %601
      %611 = vrot.lane.b32.xlu0 %v447, 96
      %v612 = vpop.permute.xlu0 %611
      %613 = vrot.lane.b32.xlu0 %v451, 96
      %v614 = vpop.permute.xlu0 %613
      %615 = vrot.lane.b32.xlu0 %v457, 96
      %v616 = vpop.permute.xlu0 %615
      %617 = vrot.lane.b32.xlu0 %v461, 96
      %v618 = vpop.permute.xlu0 %617
      %619 = vrot.lane.b32.xlu0 %v467, 96
      %v620 = vpop.permute.xlu0 %619
      %621 = vrot.lane.b32.xlu0 %v471, 96
      %v622 = vpop.permute.xlu0 %621
      %623 = vrot.lane.b32.xlu0 %v477, 96
      %v624 = vpop.permute.xlu0 %623
      %625 = vrot.lane.b32.xlu0 %v481, 96
      %v626 = vpop.permute.xlu0 %625
      %635 = vrot.lane.b32.xlu0 %v447, 80
      %v636 = vpop.permute.xlu0 %635
      %637 = vrot.lane.b32.xlu0 %v451, 80
      %v638 = vpop.permute.xlu0 %637
      %639 = vrot.lane.b32.xlu0 %v457, 80
      %v640 = vpop.permute.xlu0 %639
      %641 = vrot.lane.b32.xlu0 %v461, 80
      %v642 = vpop.permute.xlu0 %641
      %643 = vrot.lane.b32.xlu0 %v467, 80
      %v644 = vpop.permute.xlu0 %643
      %645 = vrot.lane.b32.xlu0 %v471, 80
      %v646 = vpop.permute.xlu0 %645
      %647 = vrot.lane.b32.xlu0 %v477, 80
      %v648 = vpop.permute.xlu0 %647
      %649 = vrot.lane.b32.xlu0 %v481, 80
      %v650 = vpop.permute.xlu0 %649
      %v659 = vpack.c.bf16 %v451, %v447
      %v660 = vpack.c.bf16 %v461, %v457
      %v661 = vpack.c.bf16 %v471, %v467
      %v662 = vpack.c.bf16 %v481, %v477
      %v663 = vpack.c.bf16 %v590, %v588
      %v664 = vpack.c.bf16 %v594, %v592
      %v665 = vpack.c.bf16 %v598, %v596
      %v666 = vpack.c.bf16 %v602, %v600
      %v667 = vpack.c.bf16 %v614, %v612
      %v668 = vpack.c.bf16 %v618, %v616
      %v669 = vpack.c.bf16 %v622, %v620
      %v670 = vpack.c.bf16 %v626, %v624
      %v671 = vpack.c.bf16 %v638, %v636
      %v672 = vpack.c.bf16 %v642, %v640
      %v673 = vpack.c.bf16 %v646, %v644
      %v674 = vpack.c.bf16 %v650, %v648
      %679 = vrot.lane.b32.xlu0 %v563, 64
      %v680 = vpop.permute.xlu0 %679
      %681 = vrot.lane.b32.xlu0 %v564, 64
      %v682 = vpop.permute.xlu0 %681
      %683 = vrot.lane.b32.xlu0 %v565, 64
      %v684 = vpop.permute.xlu0 %683
      %685 = vrot.lane.b32.xlu0 %v566, 64
      %v686 = vpop.permute.xlu0 %685
      %vm687 = vcmask 130048
      %v689 = vsel %vm687, %v563, 0
      %v692 = vsel %vm687, %v564, 0
      %v695 = vsel %vm687, %v565, 0
      %v698 = vsel %vm687, %v566, 0
      %v701 = vsel %vm687, %v680, 0
      %v704 = vsel %vm687, %v682, 0
      %v707 = vsel %vm687, %v684, 0
      %v710 = vsel %vm687, %v686, 0
      %712 = vmatprep.subr.bf16.mxu0 0
      %713 = vmatpush1.bf16.xpose.msra.mxu0 %v701
      %714 = vmatprep.subr.bf16.mxu0 0
      %715 = vmatpush1.bf16.xpose.msra.mxu0 %v704
      %716 = vmatprep.subr.bf16.mxu0 0
      %717 = vmatpush1.bf16.xpose.msra.mxu0 %v707
      %718 = vmatprep.subr.bf16.mxu0 0
      %719 = vmatpush1.bf16.xpose.msra.mxu0 %v710
      %720 = vmatprep.subr.bf16.mxu0 0
      %721 = vmatpush1.bf16.xpose.msra.mxu0 0
      %722 = vmatprep.subr.bf16.mxu0 0
      %723 = vmatpush1.bf16.xpose.msra.mxu0 0
      %724 = vmatprep.subr.bf16.mxu0 0
      %725 = vmatpush1.bf16.xpose.msra.mxu0 0
      %726 = vmatprep.subr.bf16.mxu0 0
      %727 = vmatpush1.bf16.xpose.msra.mxu0 0
      %728 = vmatprep.subr.bf16.mxu0 0
      %729 = vmatpush1.bf16.xpose.msra.mxu0 0
      %730 = vmatprep.subr.bf16.mxu0 0
      %731 = vmatpush1.bf16.xpose.msra.mxu0 0
      %732 = vmatprep.subr.bf16.mxu0 0
      %733 = vmatpush1.bf16.xpose.msra.mxu0 0
      %734 = vmatprep.subr.bf16.mxu0 0
      %735 = vmatpush1.bf16.xpose.msra.mxu0 0
      %736 = vmatprep.subr.bf16.mxu0 0
      %737 = vmatpush1.bf16.xpose.msra.mxu0 0
      %738 = vmatprep.subr.bf16.mxu0 0
      %739 = vmatpush1.bf16.xpose.msra.mxu0 0
      %740 = vmatprep.subr.bf16.mxu0 0
      %741 = vmatpush1.bf16.xpose.msra.mxu0 0
      %742 = vmatprep.subr.bf16.mxu0 0
      %743 = vmatpush1.bf16.xpose.msra.mxu0 0
      %744 = vmatprep.mubr.bf16.mxu0 0
      %745 = vmatmul.mubr.bf16.gmra.mrb[0].mxu0 %v689
      %v746 = vpop.f32.mrb[0].mxu0
      %v747 = vadd.f32 0.0, %v746
      %v748 = vpop.f32.mrb[0].mxu0
      %v749 = vpop.f32.mrb[0].mxu0
      %v750 = vadd.f32 0.0, %v749
      %v751 = vpop.f32.mrb[0].mxu0
      %752 = vmatprep.mubr.bf16.mxu0 0
      %753 = vmatmul.mubr.bf16.gmra.mrb[0].mxu0 %v692
      %v754 = vpop.f32.mrb[0].mxu0
      %v755 = vadd.f32 0.0, %v754
      %v756 = vpop.f32.mrb[0].mxu0
      %v757 = vpop.f32.mrb[0].mxu0
      %v758 = vadd.f32 0.0, %v757
      %v759 = vpop.f32.mrb[0].mxu0
      %760 = vmatprep.mubr.bf16.mxu0 0
      %761 = vmatmul.mubr.bf16.gmra.mrb[0].mxu0 %v695
      %v762 = vpop.f32.mrb[0].mxu0
      %v763 = vadd.f32 0.0, %v762
      %v764 = vpop.f32.mrb[0].mxu0
      %v765 = vpop.f32.mrb[0].mxu0
      %v766 = vadd.f32 0.0, %v765
      %v767 = vpop.f32.mrb[0].mxu0
      %768 = vmatprep.mubr.bf16.mxu0 0
      %769 = vmatmul.mubr.bf16.gmra.mrb[0].mxu0 %v698
      %v770 = vpop.f32.mrb[0].mxu0
      %v771 = vadd.f32 0.0, %v770
      %v772 = vpop.f32.mrb[0].mxu0
      %v773 = vpop.f32.mrb[0].mxu0
      %v774 = vadd.f32 0.0, %v773
      %v775 = vpop.f32.mrb[0].mxu0
      %776 = vdwg.mxu0
      %781 = vrot.lane.b32.xlu0 %v567, 64
      %v782 = vpop.permute.xlu0 %781
      %783 = vrot.lane.b32.xlu0 %v568, 64
      %v784 = vpop.permute.xlu0 %783
      %785 = vrot.lane.b32.xlu0 %v569, 64
      %v786 = vpop.permute.xlu0 %785
      %787 = vrot.lane.b32.xlu0 %v570, 64
      %v788 = vpop.permute.xlu0 %787
      %v790 = vsel %vm687, %v567, 0
      %v793 = vsel %vm687, %v568, 0
      %v796 = vsel %vm687, %v569, 0
      %v799 = vsel %vm687, %v570, 0
      %v802 = vsel %vm687, %v782, 0
      %v805 = vsel %vm687, %v784, 0
      %v808 = vsel %vm687, %v786, 0
      %v811 = vsel %vm687, %v788, 0
      %813 = vmatprep.subr.bf16.mxu0 0
      %814 = vmatpush1.bf16.xpose.msra.mxu0 %v802
      %815 = vmatprep.subr.bf16.mxu0 0
      %816 = vmatpush1.bf16.xpose.msra.mxu0 %v805
      %817 = vmatprep.subr.bf16.mxu0 0
      %818 = vmatpush1.bf16.xpose.msra.mxu0 %v808
      %819 = vmatprep.subr.bf16.mxu0 0
      %820 = vmatpush1.bf16.xpose.msra.mxu0 %v811
      %821 = vmatprep.subr.bf16.mxu0 0
      %822 = vmatpush1.bf16.xpose.msra.mxu0 0
      %823 = vmatprep.subr.bf16.mxu0 0
      %824 = vmatpush1.bf16.xpose.msra.mxu0 0
      %825 = vmatprep.subr.bf16.mxu0 0
      %826 = vmatpush1.bf16.xpose.msra.mxu0 0
      %827 = vmatprep.subr.bf16.mxu0 0
      %828 = vmatpush1.bf16.xpose.msra.mxu0 0
      %829 = vmatprep.subr.bf16.mxu0 0
      %830 = vmatpush1.bf16.xpose.msra.mxu0 0
      %831 = vmatprep.subr.bf16.mxu0 0
      %832 = vmatpush1.bf16.xpose.msra.mxu0 0
      %833 = vmatprep.subr.bf16.mxu0 0
      %834 = vmatpush1.bf16.xpose.msra.mxu0 0
      %835 = vmatprep.subr.bf16.mxu0 0
      %836 = vmatpush1.bf16.xpose.msra.mxu0 0
      %837 = vmatprep.subr.bf16.mxu0 0
      %838 = vmatpush1.bf16.xpose.msra.mxu0 0
      %839 = vmatprep.subr.bf16.mxu0 0
      %840 = vmatpush1.bf16.xpose.msra.mxu0 0
      %841 = vmatprep.subr.bf16.mxu0 0
      %842 = vmatpush1.bf16.xpose.msra.mxu0 0
      %843 = vmatprep.subr.bf16.mxu0 0
      %844 = vmatpush1.bf16.xpose.msra.mxu0 0
      %845 = vmatprep.mubr.bf16.mxu0 0
      %846 = vmatmul.mubr.bf16.gmra.mrb[0].mxu0 %v790
      %v847 = vpop.f32.mrb[0].mxu0
      %v848 = vadd.f32 0.0, %v847
      %v849 = vpop.f32.mrb[0].mxu0
      %v850 = vpop.f32.mrb[0].mxu0
      %v851 = vadd.f32 0.0, %v850
      %v852 = vpop.f32.mrb[0].mxu0
      %853 = vmatprep.mubr.bf16.mxu0 0
      %854 = vmatmul.mubr.bf16.gmra.mrb[0].mxu0 %v793
      %v855 = vpop.f32.mrb[0].mxu0
      %v856 = vadd.f32 0.0, %v855
      %v857 = vpop.f32.mrb[0].mxu0
      %v858 = vpop.f32.mrb[0].mxu0
      %v859 = vadd.f32 0.0, %v858
      %v860 = vpop.f32.mrb[0].mxu0
      %861 = vmatprep.mubr.bf16.mxu0 0
      %862 = vmatmul.mubr.bf16.gmra.mrb[0].mxu0 %v796
      %v863 = vpop.f32.mrb[0].mxu0
      %v864 = vadd.f32 0.0, %v863
      %v865 = vpop.f32.mrb[0].mxu0
      %v866 = vpop.f32.mrb[0].mxu0
      %v867 = vadd.f32 0.0, %v866
      %v868 = vpop.f32.mrb[0].mxu0
      %869 = vmatprep.mubr.bf16.mxu0 0
      %870 = vmatmul.mubr.bf16.gmra.mrb[0].mxu0 %v799
      %v871 = vpop.f32.mrb[0].mxu0
      %v872 = vadd.f32 0.0, %v871
      %v873 = vpop.f32.mrb[0].mxu0
      %v874 = vpop.f32.mrb[0].mxu0
      %v875 = vadd.f32 0.0, %v874
      %v876 = vpop.f32.mrb[0].mxu0
      %877 = vdwg.mxu0
      %882 = vrot.lane.b32.xlu0 %v571, 64
      %v883 = vpop.permute.xlu0 %882
      %884 = vrot.lane.b32.xlu0 %v572, 64
      %v885 = vpop.permute.xlu0 %884
      %886 = vrot.lane.b32.xlu0 %v573, 64
      %v887 = vpop.permute.xlu0 %886
      %888 = vrot.lane.b32.xlu0 %v574, 64
      %v889 = vpop.permute.xlu0 %888
      %v891 = vsel %vm687, %v571, 0
      %v894 = vsel %vm687, %v572, 0
      %v897 = vsel %vm687, %v573, 0
      %v900 = vsel %vm687, %v574, 0
      %v903 = vsel %vm687, %v883, 0
      %v906 = vsel %vm687, %v885, 0
      %v909 = vsel %vm687, %v887, 0
      %v912 = vsel %vm687, %v889, 0
      %914 = vmatprep.subr.bf16.mxu0 0
      %915 = vmatpush1.bf16.xpose.msra.mxu0 %v903
      %916 = vmatprep.subr.bf16.mxu0 0
      %917 = vmatpush1.bf16.xpose.msra.mxu0 %v906
      %918 = vmatprep.subr.bf16.mxu0 0
      %919 = vmatpush1.bf16.xpose.msra.mxu0 %v909
      %920 = vmatprep.subr.bf16.mxu0 0
      %921 = vmatpush1.bf16.xpose.msra.mxu0 %v912
      %922 = vmatprep.subr.bf16.mxu0 0
      %923 = vmatpush1.bf16.xpose.msra.mxu0 0
      %924 = vmatprep.subr.bf16.mxu0 0
      %925 = vmatpush1.bf16.xpose.msra.mxu0 0
      %926 = vmatprep.subr.bf16.mxu0 0
      %927 = vmatpush1.bf16.xpose.msra.mxu0 0
      %928 = vmatprep.subr.bf16.mxu0 0
      %929 = vmatpush1.bf16.xpose.msra.mxu0 0
      %930 = vmatprep.subr.bf16.mxu0 0
      %931 = vmatpush1.bf16.xpose.msra.mxu0 0
      %932 = vmatprep.subr.bf16.mxu0 0
      %933 = vmatpush1.bf16.xpose.msra.mxu0 0
      %934 = vmatprep.subr.bf16.mxu0 0
      %935 = vmatpush1.bf16.xpose.msra.mxu0 0
      %936 = vmatprep.subr.bf16.mxu0 0
      %937 = vmatpush1.bf16.xpose.msra.mxu0 0
      %938 = vmatprep.subr.bf16.mxu0 0
      %939 = vmatpush1.bf16.xpose.msra.mxu0 0
      %940 = vmatprep.subr.bf16.mxu0 0
      %941 = vmatpush1.bf16.xpose.msra.mxu0 0
      %942 = vmatprep.subr.bf16.mxu0 0
      %943 = vmatpush1.bf16.xpose.msra.mxu0 0
      %944 = vmatprep.subr.bf16.mxu0 0
      %945 = vmatpush1.bf16.xpose.msra.mxu0 0
      %946 = vmatprep.mubr.bf16.mxu0 0
      %947 = vmatmul.mubr.bf16.gmra.mrb[0].mxu0 %v891
      %v948 = vpop.f32.mrb[0].mxu0
      %v949 = vadd.f32 0.0, %v948
      %v950 = vpop.f32.mrb[0].mxu0
      %v951 = vpop.f32.mrb[0].mxu0
      %v952 = vadd.f32 0.0, %v951
      %v953 = vpop.f32.mrb[0].mxu0
      %954 = vmatprep.mubr.bf16.mxu0 0
      %955 = vmatmul.mubr.bf16.gmra.mrb[0].mxu0 %v894
      %v956 = vpop.f32.mrb[0].mxu0
      %v957 = vadd.f32 0.0, %v956
      %v958 = vpop.f32.mrb[0].mxu0
      %v959 = vpop.f32.mrb[0].mxu0
      %v960 = vadd.f32 0.0, %v959
      %v961 = vpop.f32.mrb[0].mxu0
      %962 = vmatprep.mubr.bf16.mxu0 0
      %963 = vmatmul.mubr.bf16.gmra.mrb[0].mxu0 %v897
      %v964 = vpop.f32.mrb[0].mxu0
      %v965 = vadd.f32 0.0, %v964
      %v966 = vpop.f32.mrb[0].mxu0
      %v967 = vpop.f32.mrb[0].mxu0
      %v968 = vadd.f32 0.0, %v967
      %v969 = vpop.f32.mrb[0].mxu0
      %970 = vmatprep.mubr.bf16.mxu0 0
      %971 = vmatmul.mubr.bf16.gmra.mrb[0].mxu0 %v900
      %v972 = vpop.f32.mrb[0].mxu0
      %v973 = vadd.f32 0.0, %v972
      %v974 = vpop.f32.mrb[0].mxu0
      %v975 = vpop.f32.mrb[0].mxu0
      %v976 = vadd.f32 0.0, %v975
      %v977 = vpop.f32.mrb[0].mxu0
      %978 = vdwg.mxu0
      %983 = vrot.lane.b32.xlu0 %v575, 64
      %v984 = vpop.permute.xlu0 %983
      %985 = vrot.lane.b32.xlu0 %v576, 64
      %v986 = vpop.permute.xlu0 %985
      %987 = vrot.lane.b32.xlu0 %v577, 64
      %v988 = vpop.permute.xlu0 %987
      %989 = vrot.lane.b32.xlu0 %v578, 64
      %v990 = vpop.permute.xlu0 %989
      %v992 = vsel %vm687, %v575, 0
      %v995 = vsel %vm687, %v576, 0
      %v998 = vsel %vm687, %v577, 0
      %v1001 = vsel %vm687, %v578, 0
      %v1004 = vsel %vm687, %v984, 0
      %v1007 = vsel %vm687, %v986, 0
      %v1010 = vsel %vm687, %v988, 0
      %v1013 = vsel %vm687, %v990, 0
      %1015 = vmatprep.subr.bf16.mxu0 0
      %1016 = vmatpush1.bf16.xpose.msra.mxu0 %v1004
      %1017 = vmatprep.subr.bf16.mxu0 0
      %1018 = vmatpush1.bf16.xpose.msra.mxu0 %v1007
      %1019 = vmatprep.subr.bf16.mxu0 0
      %1020 = vmatpush1.bf16.xpose.msra.mxu0 %v1010
      %1021 = vmatprep.subr.bf16.mxu0 0
      %1022 = vmatpush1.bf16.xpose.msra.mxu0 %v1013
      %1023 = vmatprep.subr.bf16.mxu0 0
      %1024 = vmatpush1.bf16.xpose.msra.mxu0 0
      %1025 = vmatprep.subr.bf16.mxu0 0
      %1026 = vmatpush1.bf16.xpose.msra.mxu0 0
      %1027 = vmatprep.subr.bf16.mxu0 0
      %1028 = vmatpush1.bf16.xpose.msra.mxu0 0
      %1029 = vmatprep.subr.bf16.mxu0 0
      %1030 = vmatpush1.bf16.xpose.msra.mxu0 0
      %1031 = vmatprep.subr.bf16.mxu0 0
      %1032 = vmatpush1.bf16.xpose.msra.mxu0 0
      %1033 = vmatprep.subr.bf16.mxu0 0
      %1034 = vmatpush1.bf16.xpose.msra.mxu0 0
      %1035 = vmatprep.subr.bf16.mxu0 0
      %1036 = vmatpush1.bf16.xpose.msra.mxu0 0
      %1037 = vmatprep.subr.bf16.mxu0 0
      %1038 = vmatpush1.bf16.xpose.msra.mxu0 0
      %1039 = vmatprep.subr.bf16.mxu0 0
      %1040 = vmatpush1.bf16.xpose.msra.mxu0 0
      %1041 = vmatprep.subr.bf16.mxu0 0
      %1042 = vmatpush1.bf16.xpose.msra.mxu0 0
      %1043 = vmatprep.subr.bf16.mxu0 0
      %1044 = vmatpush1.bf16.xpose.msra.mxu0 0
      %1045 = vmatprep.subr.bf16.mxu0 0
      %1046 = vmatpush1.bf16.xpose.msra.mxu0 0
      %1047 = vmatprep.mubr.bf16.mxu0 0
      %1048 = vmatmul.mubr.bf16.gmra.mrb[0].mxu0 %v992
      %v1049 = vpop.f32.mrb[0].mxu0
      %v1050 = vadd.f32 0.0, %v1049
      %v1051 = vpop.f32.mrb[0].mxu0
      %v1052 = vpop.f32.mrb[0].mxu0
      %v1053 = vadd.f32 0.0, %v1052
      %v1054 = vpop.f32.mrb[0].mxu0
      %1055 = vmatprep.mubr.bf16.mxu0 0
      %1056 = vmatmul.mubr.bf16.gmra.mrb[0].mxu0 %v995
      %v1057 = vpop.f32.mrb[0].mxu0
      %v1058 = vadd.f32 0.0, %v1057
      %v1059 = vpop.f32.mrb[0].mxu0
      %v1060 = vpop.f32.mrb[0].mxu0
      %v1061 = vadd.f32 0.0, %v1060
      %v1062 = vpop.f32.mrb[0].mxu0
      %1063 = vmatprep.mubr.bf16.mxu0 0
      %1064 = vmatmul.mubr.bf16.gmra.mrb[0].mxu0 %v998
      %v1065 = vpop.f32.mrb[0].mxu0
      %v1066 = vadd.f32 0.0, %v1065
      %v1067 = vpop.f32.mrb[0].mxu0
      %v1068 = vpop.f32.mrb[0].mxu0
      %v1069 = vadd.f32 0.0, %v1068
      %v1070 = vpop.f32.mrb[0].mxu0
      %1071 = vmatprep.mubr.bf16.mxu0 0
      %1072 = vmatmul.mubr.bf16.gmra.mrb[0].mxu0 %v1001
      %v1073 = vpop.f32.mrb[0].mxu0
      %v1074 = vadd.f32 0.0, %v1073
      %v1075 = vpop.f32.mrb[0].mxu0
      %v1076 = vpop.f32.mrb[0].mxu0
      %v1077 = vadd.f32 0.0, %v1076
      %v1078 = vpop.f32.mrb[0].mxu0
      %1079 = vdwg.mxu0
      %vm1080 = vcmask 523264
      %v1081 = vsel %vm1080, %v747, -inf
      %1082 = vmax.xlane.f32.xlu0 %v1081
      %v1083 = vpop.xlane.xlu0 %1082
      %v1084 = vsel %vm1080, %v750, -inf
      %1085 = vmax.xlane.f32.xlu0 %v1084
      %v1086 = vpop.xlane.xlu0 %1085
      %v1087 = vsel %vm1080, %v755, -inf
      %1088 = vmax.xlane.f32.xlu0 %v1087
      %v1089 = vpop.xlane.xlu0 %1088
      %v1090 = vsel %vm1080, %v758, -inf
      %1091 = vmax.xlane.f32.xlu0 %v1090
      %v1092 = vpop.xlane.xlu0 %1091
      %v1093 = vsel %vm1080, %v763, -inf
      %1094 = vmax.xlane.f32.xlu0 %v1093
      %v1095 = vpop.xlane.xlu0 %1094
      %v1096 = vsel %vm1080, %v766, -inf
      %1097 = vmax.xlane.f32.xlu0 %v1096
      %v1098 = vpop.xlane.xlu0 %1097
      %v1099 = vsel %vm1080, %v771, -inf
      %1100 = vmax.xlane.f32.xlu0 %v1099
      %v1101 = vpop.xlane.xlu0 %1100
      %v1102 = vsel %vm1080, %v774, -inf
      %1103 = vmax.xlane.f32.xlu0 %v1102
      %v1104 = vpop.xlane.xlu0 %1103
      %v1105 = vsel %vm1080, %v848, -inf
      %1106 = vmax.xlane.f32.xlu0 %v1105
      %v1107 = vpop.xlane.xlu0 %1106
      %v1108 = vsel %vm1080, %v851, -inf
      %1109 = vmax.xlane.f32.xlu0 %v1108
      %v1110 = vpop.xlane.xlu0 %1109
      %v1111 = vsel %vm1080, %v856, -inf
      %1112 = vmax.xlane.f32.xlu0 %v1111
      %v1113 = vpop.xlane.xlu0 %1112
      %v1114 = vsel %vm1080, %v859, -inf
      %1115 = vmax.xlane.f32.xlu0 %v1114
      %v1116 = vpop.xlane.xlu0 %1115
      %v1117 = vsel %vm1080, %v864, -inf
      %1118 = vmax.xlane.f32.xlu0 %v1117
      %v1119 = vpop.xlane.xlu0 %1118
      %v1120 = vsel %vm1080, %v867, -inf
      %1121 = vmax.xlane.f32.xlu0 %v1120
      %v1122 = vpop.xlane.xlu0 %1121
      %v1123 = vsel %vm1080, %v872, -inf
      %1124 = vmax.xlane.f32.xlu0 %v1123
      %v1125 = vpop.xlane.xlu0 %1124
      %v1126 = vsel %vm1080, %v875, -inf
      %1127 = vmax.xlane.f32.xlu0 %v1126
      %v1128 = vpop.xlane.xlu0 %1127
      %v1129 = vsel %vm1080, %v949, -inf
      %1130 = vmax.xlane.f32.xlu0 %v1129
      %v1131 = vpop.xlane.xlu0 %1130
      %v1132 = vsel %vm1080, %v952, -inf
      %1133 = vmax.xlane.f32.xlu0 %v1132
      %v1134 = vpop.xlane.xlu0 %1133
      %v1135 = vsel %vm1080, %v957, -inf
      %1136 = vmax.xlane.f32.xlu0 %v1135
      %v1137 = vpop.xlane.xlu0 %1136
      %v1138 = vsel %vm1080, %v960, -inf
      %1139 = vmax.xlane.f32.xlu0 %v1138
      %v1140 = vpop.xlane.xlu0 %1139
      %v1141 = vsel %vm1080, %v965, -inf
      %1142 = vmax.xlane.f32.xlu0 %v1141
      %v1143 = vpop.xlane.xlu0 %1142
      %v1144 = vsel %vm1080, %v968, -inf
      %1145 = vmax.xlane.f32.xlu0 %v1144
      %v1146 = vpop.xlane.xlu0 %1145
      %v1147 = vsel %vm1080, %v973, -inf
      %1148 = vmax.xlane.f32.xlu0 %v1147
      %v1149 = vpop.xlane.xlu0 %1148
      %v1150 = vsel %vm1080, %v976, -inf
      %1151 = vmax.xlane.f32.xlu0 %v1150
      %v1152 = vpop.xlane.xlu0 %1151
      %v1153 = vsel %vm1080, %v1050, -inf
      %1154 = vmax.xlane.f32.xlu0 %v1153
      %v1155 = vpop.xlane.xlu0 %1154
      %v1156 = vsel %vm1080, %v1053, -inf
      %1157 = vmax.xlane.f32.xlu0 %v1156
      %v1158 = vpop.xlane.xlu0 %1157
      %v1159 = vsel %vm1080, %v1058, -inf
      %1160 = vmax.xlane.f32.xlu0 %v1159
      %v1161 = vpop.xlane.xlu0 %1160
      %v1162 = vsel %vm1080, %v1061, -inf
      %1163 = vmax.xlane.f32.xlu0 %v1162
      %v1164 = vpop.xlane.xlu0 %1163
      %v1165 = vsel %vm1080, %v1066, -inf
      %1166 = vmax.xlane.f32.xlu0 %v1165
      %v1167 = vpop.xlane.xlu0 %1166
      %v1168 = vsel %vm1080, %v1069, -inf
      %1169 = vmax.xlane.f32.xlu0 %v1168
      %v1170 = vpop.xlane.xlu0 %1169
      %v1171 = vsel %vm1080, %v1074, -inf
      %1172 = vmax.xlane.f32.xlu0 %v1171
      %v1173 = vpop.xlane.xlu0 %1172
      %v1174 = vsel %vm1080, %v1077, -inf
      %1175 = vmax.xlane.f32.xlu0 %v1174
      %v1176 = vpop.xlane.xlu0 %1175
      %v1177 = vsub.f32 %v747, %v1083
      %v1178 = vsub.f32 %v750, %v1086
      %v1179 = vsub.f32 %v755, %v1089
      %v1180 = vsub.f32 %v758, %v1092
      %v1181 = vsub.f32 %v763, %v1095
      %v1182 = vsub.f32 %v766, %v1098
      %v1183 = vsub.f32 %v771, %v1101
      %v1184 = vsub.f32 %v774, %v1104
      %v1185 = vsub.f32 %v848, %v1107
      %v1186 = vsub.f32 %v851, %v1110
      %v1187 = vsub.f32 %v856, %v1113
      %v1188 = vsub.f32 %v859, %v1116
      %v1189 = vsub.f32 %v864, %v1119
      %v1190 = vsub.f32 %v867, %v1122
      %v1191 = vsub.f32 %v872, %v1125
      %v1192 = vsub.f32 %v875, %v1128
      %v1193 = vsub.f32 %v949, %v1131
      %v1194 = vsub.f32 %v952, %v1134
      %v1195 = vsub.f32 %v957, %v1137
      %v1196 = vsub.f32 %v960, %v1140
      %v1197 = vsub.f32 %v965, %v1143
      %v1198 = vsub.f32 %v968, %v1146
      %v1199 = vsub.f32 %v973, %v1149
      %v1200 = vsub.f32 %v976, %v1152
      %v1201 = vsub.f32 %v1050, %v1155
      %v1202 = vsub.f32 %v1053, %v1158
      %v1203 = vsub.f32 %v1058, %v1161
      %v1204 = vsub.f32 %v1061, %v1164
      %v1205 = vsub.f32 %v1066, %v1167
      %v1206 = vsub.f32 %v1069, %v1170
      %v1207 = vsub.f32 %v1074, %v1173
      %v1208 = vsub.f32 %v1077, %v1176
      %v1209 = vmul.f32 %v1177, 1.442695
      %v1210 = vpow.pop %v1209
      %v1211 = vmul.f32 %v1178, 1.442695
      %v1212 = vpow.pop %v1211
      %v1213 = vmul.f32 %v1179, 1.442695
      %v1214 = vpow.pop %v1213
      %v1215 = vmul.f32 %v1180, 1.442695
      %v1216 = vpow.pop %v1215
      %v1217 = vmul.f32 %v1181, 1.442695
      %v1218 = vpow.pop %v1217
      %v1219 = vmul.f32 %v1182, 1.442695
      %v1220 = vpow.pop %v1219
      %v1221 = vmul.f32 %v1183, 1.442695
      %v1222 = vpow.pop %v1221
      %v1223 = vmul.f32 %v1184, 1.442695
      %v1224 = vpow.pop %v1223
      %v1225 = vmul.f32 %v1185, 1.442695
      %v1226 = vpow.pop %v1225
      %v1227 = vmul.f32 %v1186, 1.442695
      %v1228 = vpow.pop %v1227
      %v1229 = vmul.f32 %v1187, 1.442695
      %v1230 = vpow.pop %v1229
      %v1231 = vmul.f32 %v1188, 1.442695
      %v1232 = vpow.pop %v1231
      %v1233 = vmul.f32 %v1189, 1.442695
      %v1234 = vpow.pop %v1233
      %v1235 = vmul.f32 %v1190, 1.442695
      %v1236 = vpow.pop %v1235
      %v1237 = vmul.f32 %v1191, 1.442695
      %v1238 = vpow.pop %v1237
      %v1239 = vmul.f32 %v1192, 1.442695
      %v1240 = vpow.pop %v1239
      %v1241 = vmul.f32 %v1193, 1.442695
      %v1242 = vpow.pop %v1241
      %v1243 = vmul.f32 %v1194, 1.442695
      %v1244 = vpow.pop %v1243
      %v1245 = vmul.f32 %v1195, 1.442695
      %v1246 = vpow.pop %v1245
      %v1247 = vmul.f32 %v1196, 1.442695
      %v1248 = vpow.pop %v1247
      %v1249 = vmul.f32 %v1197, 1.442695
      %v1250 = vpow.pop %v1249
      %v1251 = vmul.f32 %v1198, 1.442695
      %v1252 = vpow.pop %v1251
      %v1253 = vmul.f32 %v1199, 1.442695
      %v1254 = vpow.pop %v1253
      %v1255 = vmul.f32 %v1200, 1.442695
      %v1256 = vpow.pop %v1255
      %v1257 = vmul.f32 %v1201, 1.442695
      %v1258 = vpow.pop %v1257
      %v1259 = vmul.f32 %v1202, 1.442695
      %v1260 = vpow.pop %v1259
      %v1261 = vmul.f32 %v1203, 1.442695
      %v1262 = vpow.pop %v1261
      %v1263 = vmul.f32 %v1204, 1.442695
      %v1264 = vpow.pop %v1263
      %v1265 = vmul.f32 %v1205, 1.442695
      %v1266 = vpow.pop %v1265
      %v1267 = vmul.f32 %v1206, 1.442695
      %v1268 = vpow.pop %v1267
      %v1269 = vmul.f32 %v1207, 1.442695
      %v1270 = vpow.pop %v1269
      %v1271 = vmul.f32 %v1208, 1.442695
      %v1272 = vpow.pop %v1271
      %v1273 = vsel %vm1080, %v1210, 0.0
      %1274 = vadd.xlane.f32.xlu0 %v1273
      %v1275 = vpop.xlane.xlu0 %1274
      %v1276 = vsel %vm1080, %v1212, 0.0
      %1277 = vadd.xlane.f32.xlu0 %v1276
      %v1278 = vpop.xlane.xlu0 %1277
      %v1279 = vsel %vm1080, %v1214, 0.0
      %1280 = vadd.xlane.f32.xlu0 %v1279
      %v1281 = vpop.xlane.xlu0 %1280
      %v1282 = vsel %vm1080, %v1216, 0.0
      %1283 = vadd.xlane.f32.xlu0 %v1282
      %v1284 = vpop.xlane.xlu0 %1283
      %v1285 = vsel %vm1080, %v1218, 0.0
      %1286 = vadd.xlane.f32.xlu0 %v1285
      %v1287 = vpop.xlane.xlu0 %1286
      %v1288 = vsel %vm1080, %v1220, 0.0
      %1289 = vadd.xlane.f32.xlu0 %v1288
      %v1290 = vpop.xlane.xlu0 %1289
      %v1291 = vsel %vm1080, %v1222, 0.0
      %1292 = vadd.xlane.f32.xlu0 %v1291
      %v1293 = vpop.xlane.xlu0 %1292
      %v1294 = vsel %vm1080, %v1224, 0.0
      %1295 = vadd.xlane.f32.xlu0 %v1294
      %v1296 = vpop.xlane.xlu0 %1295
      %v1297 = vsel %vm1080, %v1226, 0.0
      %1298 = vadd.xlane.f32.xlu0 %v1297
      %v1299 = vpop.xlane.xlu0 %1298
      %v1300 = vsel %vm1080, %v1228, 0.0
      %1301 = vadd.xlane.f32.xlu0 %v1300
      %v1302 = vpop.xlane.xlu0 %1301
      %v1303 = vsel %vm1080, %v1230, 0.0
      %1304 = vadd.xlane.f32.xlu0 %v1303
      %v1305 = vpop.xlane.xlu0 %1304
      %v1306 = vsel %vm1080, %v1232, 0.0
      %1307 = vadd.xlane.f32.xlu0 %v1306
      %v1308 = vpop.xlane.xlu0 %1307
      %v1309 = vsel %vm1080, %v1234, 0.0
      %1310 = vadd.xlane.f32.xlu0 %v1309
      %v1311 = vpop.xlane.xlu0 %1310
      %v1312 = vsel %vm1080, %v1236, 0.0
      %1313 = vadd.xlane.f32.xlu0 %v1312
      %v1314 = vpop.xlane.xlu0 %1313
      %v1315 = vsel %vm1080, %v1238, 0.0
      %1316 = vadd.xlane.f32.xlu0 %v1315
      %v1317 = vpop.xlane.xlu0 %1316
      %v1318 = vsel %vm1080, %v1240, 0.0
      %1319 = vadd.xlane.f32.xlu0 %v1318
      %v1320 = vpop.xlane.xlu0 %1319
      %v1321 = vsel %vm1080, %v1242, 0.0
      %1322 = vadd.xlane.f32.xlu0 %v1321
      %v1323 = vpop.xlane.xlu0 %1322
      %v1324 = vsel %vm1080, %v1244, 0.0
      %1325 = vadd.xlane.f32.xlu0 %v1324
      %v1326 = vpop.xlane.xlu0 %1325
      %v1327 = vsel %vm1080, %v1246, 0.0
      %1328 = vadd.xlane.f32.xlu0 %v1327
      %v1329 = vpop.xlane.xlu0 %1328
      %v1330 = vsel %vm1080, %v1248, 0.0
      %1331 = vadd.xlane.f32.xlu0 %v1330
      %v1332 = vpop.xlane.xlu0 %1331
      %v1333 = vsel %vm1080, %v1250, 0.0
      %1334 = vadd.xlane.f32.xlu0 %v1333
      %v1335 = vpop.xlane.xlu0 %1334
      %v1336 = vsel %vm1080, %v1252, 0.0
      %1337 = vadd.xlane.f32.xlu0 %v1336
      %v1338 = vpop.xlane.xlu0 %1337
      %v1339 = vsel %vm1080, %v1254, 0.0
      %1340 = vadd.xlane.f32.xlu0 %v1339
      %v1341 = vpop.xlane.xlu0 %1340
      %v1342 = vsel %vm1080, %v1256, 0.0
      %1343 = vadd.xlane.f32.xlu0 %v1342
      %v1344 = vpop.xlane.xlu0 %1343
      %v1345 = vsel %vm1080, %v1258, 0.0
      %1346 = vadd.xlane.f32.xlu0 %v1345
      %v1347 = vpop.xlane.xlu0 %1346
      %v1348 = vsel %vm1080, %v1260, 0.0
      %1349 = vadd.xlane.f32.xlu0 %v1348
      %v1350 = vpop.xlane.xlu0 %1349
      %v1351 = vsel %vm1080, %v1262, 0.0
      %1352 = vadd.xlane.f32.xlu0 %v1351
      %v1353 = vpop.xlane.xlu0 %1352
      %v1354 = vsel %vm1080, %v1264, 0.0
      %1355 = vadd.xlane.f32.xlu0 %v1354
      %v1356 = vpop.xlane.xlu0 %1355
      %v1357 = vsel %vm1080, %v1266, 0.0
      %1358 = vadd.xlane.f32.xlu0 %v1357
      %v1359 = vpop.xlane.xlu0 %1358
      %v1360 = vsel %vm1080, %v1268, 0.0
      %1361 = vadd.xlane.f32.xlu0 %v1360
      %v1362 = vpop.xlane.xlu0 %1361
      %v1363 = vsel %vm1080, %v1270, 0.0
      %1364 = vadd.xlane.f32.xlu0 %v1363
      %v1365 = vpop.xlane.xlu0 %1364
      %v1366 = vsel %vm1080, %v1272, 0.0
      %1367 = vadd.xlane.f32.xlu0 %v1366
      %v1368 = vpop.xlane.xlu0 %1367
      %v1369 = vrcp.pop %v1275
      %v1370 = vrcp.pop %v1278
      %v1371 = vrcp.pop %v1281
      %v1372 = vrcp.pop %v1284
      %v1373 = vrcp.pop %v1287
      %v1374 = vrcp.pop %v1290
      %v1375 = vrcp.pop %v1293
      %v1376 = vrcp.pop %v1296
      %v1377 = vrcp.pop %v1299
      %v1378 = vrcp.pop %v1302
      %v1379 = vrcp.pop %v1305
      %v1380 = vrcp.pop %v1308
      %v1381 = vrcp.pop %v1311
      %v1382 = vrcp.pop %v1314
      %v1383 = vrcp.pop %v1317
      %v1384 = vrcp.pop %v1320
      %v1385 = vrcp.pop %v1323
      %v1386 = vrcp.pop %v1326
      %v1387 = vrcp.pop %v1329
      %v1388 = vrcp.pop %v1332
      %v1389 = vrcp.pop %v1335
      %v1390 = vrcp.pop %v1338
      %v1391 = vrcp.pop %v1341
      %v1392 = vrcp.pop %v1344
      %v1393 = vrcp.pop %v1347
      %v1394 = vrcp.pop %v1350
      %v1395 = vrcp.pop %v1353
      %v1396 = vrcp.pop %v1356
      %v1397 = vrcp.pop %v1359
      %v1398 = vrcp.pop %v1362
      %v1399 = vrcp.pop %v1365
      %v1400 = vrcp.pop %v1368
      %v1401 = vmul.f32 %v1210, %v1369
      %v1402 = vmul.f32 %v1212, %v1370
      %v1403 = vmul.f32 %v1214, %v1371
      %v1404 = vmul.f32 %v1216, %v1372
      %v1405 = vmul.f32 %v1218, %v1373
      %v1406 = vmul.f32 %v1220, %v1374
      %v1407 = vmul.f32 %v1222, %v1375
      %v1408 = vmul.f32 %v1224, %v1376
      %v1409 = vmul.f32 %v1226, %v1377
      %v1410 = vmul.f32 %v1228, %v1378
      %v1411 = vmul.f32 %v1230, %v1379
      %v1412 = vmul.f32 %v1232, %v1380
      %v1413 = vmul.f32 %v1234, %v1381
      %v1414 = vmul.f32 %v1236, %v1382
      %v1415 = vmul.f32 %v1238, %v1383
      %v1416 = vmul.f32 %v1240, %v1384
      %v1417 = vmul.f32 %v1242, %v1385
      %v1418 = vmul.f32 %v1244, %v1386
      %v1419 = vmul.f32 %v1246, %v1387
      %v1420 = vmul.f32 %v1248, %v1388
      %v1421 = vmul.f32 %v1250, %v1389
      %v1422 = vmul.f32 %v1252, %v1390
      %v1423 = vmul.f32 %v1254, %v1391
      %v1424 = vmul.f32 %v1256, %v1392
      %v1425 = vmul.f32 %v1258, %v1393
      %v1426 = vmul.f32 %v1260, %v1394
      %v1427 = vmul.f32 %v1262, %v1395
      %v1428 = vmul.f32 %v1264, %v1396
      %v1429 = vmul.f32 %v1266, %v1397
      %v1430 = vmul.f32 %v1268, %v1398
      %v1431 = vmul.f32 %v1270, %v1399
      %v1432 = vmul.f32 %v1272, %v1400
      %v1433 = vpack.c.bf16 %v1402, %v1401
      %v1434 = vpack.c.bf16 %v1404, %v1403
      %v1435 = vpack.c.bf16 %v1406, %v1405
      %v1436 = vpack.c.bf16 %v1408, %v1407
      %v1437 = vpack.c.bf16 %v1410, %v1409
      %v1438 = vpack.c.bf16 %v1412, %v1411
      %v1439 = vpack.c.bf16 %v1414, %v1413
      %v1440 = vpack.c.bf16 %v1416, %v1415
      %v1441 = vpack.c.bf16 %v1418, %v1417
      %v1442 = vpack.c.bf16 %v1420, %v1419
      %v1443 = vpack.c.bf16 %v1422, %v1421
      %v1444 = vpack.c.bf16 %v1424, %v1423
      %v1445 = vpack.c.bf16 %v1426, %v1425
      %v1446 = vpack.c.bf16 %v1428, %v1427
      %v1447 = vpack.c.bf16 %v1430, %v1429
      %v1448 = vpack.c.bf16 %v1432, %v1431
      %v1450 = vsel %vm1080, %v1433, 0
      %v1453 = vsel %vm1080, %v1434, 0
      %v1456 = vsel %vm1080, %v1435, 0
      %v1459 = vsel %vm1080, %v1436, 0
      %1461 = vmatprep.subr.bf16.mxu0 0
      %1462 = vmatpush1.bf16.msra.mxu0 %v659
      %1463 = vmatprep.subr.bf16.mxu0 0
      %1464 = vmatpush1.bf16.msra.mxu0 %v660
      %1465 = vmatprep.subr.bf16.mxu0 0
      %1466 = vmatpush1.bf16.msra.mxu0 %v661
      %1467 = vmatprep.subr.bf16.mxu0 0
      %1468 = vmatpush1.bf16.msra.mxu0 %v662
      %1469 = vmatprep.subr.bf16.mxu0 0
      %1470 = vmatpush1.bf16.msra.mxu0 0
      %1471 = vmatprep.subr.bf16.mxu0 0
      %1472 = vmatpush1.bf16.msra.mxu0 0
      %1473 = vmatprep.subr.bf16.mxu0 0
      %1474 = vmatpush1.bf16.msra.mxu0 0
      %1475 = vmatprep.subr.bf16.mxu0 0
      %1476 = vmatpush1.bf16.msra.mxu0 0
      %1477 = vmatprep.subr.bf16.mxu0 0
      %1478 = vmatpush1.bf16.msra.mxu0 0
      %1479 = vmatprep.subr.bf16.mxu0 0
      %1480 = vmatpush1.bf16.msra.mxu0 0
      %1481 = vmatprep.subr.bf16.mxu0 0
      %1482 = vmatpush1.bf16.msra.mxu0 0
      %1483 = vmatprep.subr.bf16.mxu0 0
      %1484 = vmatpush1.bf16.msra.mxu0 0
      %1485 = vmatprep.subr.bf16.mxu0 0
      %1486 = vmatpush1.bf16.msra.mxu0 0
      %1487 = vmatprep.subr.bf16.mxu0 0
      %1488 = vmatpush1.bf16.msra.mxu0 0
      %1489 = vmatprep.subr.bf16.mxu0 0
      %1490 = vmatpush1.bf16.msra.mxu0 0
      %1491 = vmatprep.subr.bf16.mxu0 0
      %1492 = vmatpush1.bf16.msra.mxu0 0
      %1493 = vmatprep.mubr.bf16.mxu0 0
      %1494 = vmatmul.mubr.bf16.gmra.mrb[0].mxu0 %v1450
      %v1495 = vpop.f32.mrb[0].mxu0
      %v1496 = vadd.f32 0.0, %v1495
      %v1497 = vpop.f32.mrb[0].mxu0
      %v1498 = vpop.f32.mrb[0].mxu0
      %v1499 = vadd.f32 0.0, %v1498
      %v1500 = vpop.f32.mrb[0].mxu0
      %1501 = vmatprep.mubr.bf16.mxu0 0
      %1502 = vmatmul.mubr.bf16.gmra.mrb[0].mxu0 %v1453
      %v1503 = vpop.f32.mrb[0].mxu0
      %v1504 = vadd.f32 0.0, %v1503
      %v1505 = vpop.f32.mrb[0].mxu0
      %v1506 = vpop.f32.mrb[0].mxu0
      %v1507 = vadd.f32 0.0, %v1506
      %v1508 = vpop.f32.mrb[0].mxu0
      %1509 = vmatprep.mubr.bf16.mxu0 0
      %1510 = vmatmul.mubr.bf16.gmra.mrb[0].mxu0 %v1456
      %v1511 = vpop.f32.mrb[0].mxu0
      %v1512 = vadd.f32 0.0, %v1511
      %v1513 = vpop.f32.mrb[0].mxu0
      %v1514 = vpop.f32.mrb[0].mxu0
      %v1515 = vadd.f32 0.0, %v1514
      %v1516 = vpop.f32.mrb[0].mxu0
      %1517 = vmatprep.mubr.bf16.mxu0 0
      %1518 = vmatmul.mubr.bf16.gmra.mrb[0].mxu0 %v1459
      %v1519 = vpop.f32.mrb[0].mxu0
      %v1520 = vadd.f32 0.0, %v1519
      %v1521 = vpop.f32.mrb[0].mxu0
      %v1522 = vpop.f32.mrb[0].mxu0
      %v1523 = vadd.f32 0.0, %v1522
      %v1524 = vpop.f32.mrb[0].mxu0
      %1525 = vdwg.mxu0
      %v1527 = vsel %vm1080, %v1437, 0
      %v1530 = vsel %vm1080, %v1438, 0
      %v1533 = vsel %vm1080, %v1439, 0
      %v1536 = vsel %vm1080, %v1440, 0
      %1538 = vmatprep.subr.bf16.mxu0 0
      %1539 = vmatpush1.bf16.msra.mxu0 %v663
      %1540 = vmatprep.subr.bf16.mxu0 0
      %1541 = vmatpush1.bf16.msra.mxu0 %v664
      %1542 = vmatprep.subr.bf16.mxu0 0
      %1543 = vmatpush1.bf16.msra.mxu0 %v665
      %1544 = vmatprep.subr.bf16.mxu0 0
      %1545 = vmatpush1.bf16.msra.mxu0 %v666
      %1546 = vmatprep.subr.bf16.mxu0 0
      %1547 = vmatpush1.bf16.msra.mxu0 0
      %1548 = vmatprep.subr.bf16.mxu0 0
      %1549 = vmatpush1.bf16.msra.mxu0 0
      %1550 = vmatprep.subr.bf16.mxu0 0
      %1551 = vmatpush1.bf16.msra.mxu0 0
      %1552 = vmatprep.subr.bf16.mxu0 0
      %1553 = vmatpush1.bf16.msra.mxu0 0
      %1554 = vmatprep.subr.bf16.mxu0 0
      %1555 = vmatpush1.bf16.msra.mxu0 0
      %1556 = vmatprep.subr.bf16.mxu0 0
      %1557 = vmatpush1.bf16.msra.mxu0 0
      %1558 = vmatprep.subr.bf16.mxu0 0
      %1559 = vmatpush1.bf16.msra.mxu0 0
      %1560 = vmatprep.subr.bf16.mxu0 0
      %1561 = vmatpush1.bf16.msra.mxu0 0
      %1562 = vmatprep.subr.bf16.mxu0 0
      %1563 = vmatpush1.bf16.msra.mxu0 0
      %1564 = vmatprep.subr.bf16.mxu0 0
      %1565 = vmatpush1.bf16.msra.mxu0 0
      %1566 = vmatprep.subr.bf16.mxu0 0
      %1567 = vmatpush1.bf16.msra.mxu0 0
      %1568 = vmatprep.subr.bf16.mxu0 0
      %1569 = vmatpush1.bf16.msra.mxu0 0
      %1570 = vmatprep.mubr.bf16.mxu0 0
      %1571 = vmatmul.mubr.bf16.gmra.mrb[0].mxu0 %v1527
      %v1572 = vpop.f32.mrb[0].mxu0
      %v1573 = vadd.f32 0.0, %v1572
      %v1574 = vpop.f32.mrb[0].mxu0
      %v1575 = vpop.f32.mrb[0].mxu0
      %v1576 = vadd.f32 0.0, %v1575
      %v1577 = vpop.f32.mrb[0].mxu0
      %1578 = vmatprep.mubr.bf16.mxu0 0
      %1579 = vmatmul.mubr.bf16.gmra.mrb[0].mxu0 %v1530
      %v1580 = vpop.f32.mrb[0].mxu0
      %v1581 = vadd.f32 0.0, %v1580
      %v1582 = vpop.f32.mrb[0].mxu0
      %v1583 = vpop.f32.mrb[0].mxu0
      %v1584 = vadd.f32 0.0, %v1583
      %v1585 = vpop.f32.mrb[0].mxu0
      %1586 = vmatprep.mubr.bf16.mxu0 0
      %1587 = vmatmul.mubr.bf16.gmra.mrb[0].mxu0 %v1533
      %v1588 = vpop.f32.mrb[0].mxu0
      %v1589 = vadd.f32 0.0, %v1588
      %v1590 = vpop.f32.mrb[0].mxu0
      %v1591 = vpop.f32.mrb[0].mxu0
      %v1592 = vadd.f32 0.0, %v1591
      %v1593 = vpop.f32.mrb[0].mxu0
      %1594 = vmatprep.mubr.bf16.mxu0 0
      %1595 = vmatmul.mubr.bf16.gmra.mrb[0].mxu0 %v1536
      %v1596 = vpop.f32.mrb[0].mxu0
      %v1597 = vadd.f32 0.0, %v1596
      %v1598 = vpop.f32.mrb[0].mxu0
      %v1599 = vpop.f32.mrb[0].mxu0
      %v1600 = vadd.f32 0.0, %v1599
      %v1601 = vpop.f32.mrb[0].mxu0
      %1602 = vdwg.mxu0
      %v1604 = vsel %vm1080, %v1441, 0
      %v1607 = vsel %vm1080, %v1442, 0
      %v1610 = vsel %vm1080, %v1443, 0
      %v1613 = vsel %vm1080, %v1444, 0
      %1615 = vmatprep.subr.bf16.mxu0 0
      %1616 = vmatpush1.bf16.msra.mxu0 %v667
      %1617 = vmatprep.subr.bf16.mxu0 0
      %1618 = vmatpush1.bf16.msra.mxu0 %v668
      %1619 = vmatprep.subr.bf16.mxu0 0
      %1620 = vmatpush1.bf16.msra.mxu0 %v669
      %1621 = vmatprep.subr.bf16.mxu0 0
      %1622 = vmatpush1.bf16.msra.mxu0 %v670
      %1623 = vmatprep.subr.bf16.mxu0 0
      %1624 = vmatpush1.bf16.msra.mxu0 0
      %1625 = vmatprep.subr.bf16.mxu0 0
      %1626 = vmatpush1.bf16.msra.mxu0 0
      %1627 = vmatprep.subr.bf16.mxu0 0
      %1628 = vmatpush1.bf16.msra.mxu0 0
      %1629 = vmatprep.subr.bf16.mxu0 0
      %1630 = vmatpush1.bf16.msra.mxu0 0
      %1631 = vmatprep.subr.bf16.mxu0 0
      %1632 = vmatpush1.bf16.msra.mxu0 0
      %1633 = vmatprep.subr.bf16.mxu0 0
      %1634 = vmatpush1.bf16.msra.mxu0 0
      %1635 = vmatprep.subr.bf16.mxu0 0
      %1636 = vmatpush1.bf16.msra.mxu0 0
      %1637 = vmatprep.subr.bf16.mxu0 0
      %1638 = vmatpush1.bf16.msra.mxu0 0
      %1639 = vmatprep.subr.bf16.mxu0 0
      %1640 = vmatpush1.bf16.msra.mxu0 0
      %1641 = vmatprep.subr.bf16.mxu0 0
      %1642 = vmatpush1.bf16.msra.mxu0 0
      %1643 = vmatprep.subr.bf16.mxu0 0
      %1644 = vmatpush1.bf16.msra.mxu0 0
      %1645 = vmatprep.subr.bf16.mxu0 0
      %1646 = vmatpush1.bf16.msra.mxu0 0
      %1647 = vmatprep.mubr.bf16.mxu0 0
      %1648 = vmatmul.mubr.bf16.gmra.mrb[0].mxu0 %v1604
      %v1649 = vpop.f32.mrb[0].mxu0
      %v1650 = vadd.f32 0.0, %v1649
      %v1651 = vpop.f32.mrb[0].mxu0
      %v1652 = vpop.f32.mrb[0].mxu0
      %v1653 = vadd.f32 0.0, %v1652
      %v1654 = vpop.f32.mrb[0].mxu0
      %1655 = vmatprep.mubr.bf16.mxu0 0
      %1656 = vmatmul.mubr.bf16.gmra.mrb[0].mxu0 %v1607
      %v1657 = vpop.f32.mrb[0].mxu0
      %v1658 = vadd.f32 0.0, %v1657
      %v1659 = vpop.f32.mrb[0].mxu0
      %v1660 = vpop.f32.mrb[0].mxu0
      %v1661 = vadd.f32 0.0, %v1660
      %v1662 = vpop.f32.mrb[0].mxu0
      %1663 = vmatprep.mubr.bf16.mxu0 0
      %1664 = vmatmul.mubr.bf16.gmra.mrb[0].mxu0 %v1610
      %v1665 = vpop.f32.mrb[0].mxu0
      %v1666 = vadd.f32 0.0, %v1665
      %v1667 = vpop.f32.mrb[0].mxu0
      %v1668 = vpop.f32.mrb[0].mxu0
      %v1669 = vadd.f32 0.0, %v1668
      %v1670 = vpop.f32.mrb[0].mxu0
      %1671 = vmatprep.mubr.bf16.mxu0 0
      %1672 = vmatmul.mubr.bf16.gmra.mrb[0].mxu0 %v1613
      %v1673 = vpop.f32.mrb[0].mxu0
      %v1674 = vadd.f32 0.0, %v1673
      %v1675 = vpop.f32.mrb[0].mxu0
      %v1676 = vpop.f32.mrb[0].mxu0
      %v1677 = vadd.f32 0.0, %v1676
      %v1678 = vpop.f32.mrb[0].mxu0
      %1679 = vdwg.mxu0
      %v1681 = vsel %vm1080, %v1445, 0
      %v1684 = vsel %vm1080, %v1446, 0
      %v1687 = vsel %vm1080, %v1447, 0
      %v1690 = vsel %vm1080, %v1448, 0
      %1692 = vmatprep.subr.bf16.mxu0 0
      %1693 = vmatpush1.bf16.msra.mxu0 %v671
      %1694 = vmatprep.subr.bf16.mxu0 0
      %1695 = vmatpush1.bf16.msra.mxu0 %v672
      %1696 = vmatprep.subr.bf16.mxu0 0
      %1697 = vmatpush1.bf16.msra.mxu0 %v673
      %1698 = vmatprep.subr.bf16.mxu0 0
      %1699 = vmatpush1.bf16.msra.mxu0 %v674
      %1700 = vmatprep.subr.bf16.mxu0 0
      %1701 = vmatpush1.bf16.msra.mxu0 0
      %1702 = vmatprep.subr.bf16.mxu0 0
      %1703 = vmatpush1.bf16.msra.mxu0 0
      %1704 = vmatprep.subr.bf16.mxu0 0
      %1705 = vmatpush1.bf16.msra.mxu0 0
      %1706 = vmatprep.subr.bf16.mxu0 0
      %1707 = vmatpush1.bf16.msra.mxu0 0
      %1708 = vmatprep.subr.bf16.mxu0 0
      %1709 = vmatpush1.bf16.msra.mxu0 0
      %1710 = vmatprep.subr.bf16.mxu0 0
      %1711 = vmatpush1.bf16.msra.mxu0 0
      %1712 = vmatprep.subr.bf16.mxu0 0
      %1713 = vmatpush1.bf16.msra.mxu0 0
      %1714 = vmatprep.subr.bf16.mxu0 0
      %1715 = vmatpush1.bf16.msra.mxu0 0
      %1716 = vmatprep.subr.bf16.mxu0 0
      %1717 = vmatpush1.bf16.msra.mxu0 0
      %1718 = vmatprep.subr.bf16.mxu0 0
      %1719 = vmatpush1.bf16.msra.mxu0 0
      %1720 = vmatprep.subr.bf16.mxu0 0
      %1721 = vmatpush1.bf16.msra.mxu0 0
      %1722 = vmatprep.subr.bf16.mxu0 0
      %1723 = vmatpush1.bf16.msra.mxu0 0
      %1724 = vmatprep.mubr.bf16.mxu0 0
      %1725 = vmatmul.mubr.bf16.gmra.mrb[0].mxu0 %v1681
      %v1726 = vpop.f32.mrb[0].mxu0
      %v1727 = vadd.f32 0.0, %v1726
      %v1728 = vpop.f32.mrb[0].mxu0
      %v1729 = vpop.f32.mrb[0].mxu0
      %v1730 = vadd.f32 0.0, %v1729
      %v1731 = vpop.f32.mrb[0].mxu0
      %1732 = vmatprep.mubr.bf16.mxu0 0
      %1733 = vmatmul.mubr.bf16.gmra.mrb[0].mxu0 %v1684
      %v1734 = vpop.f32.mrb[0].mxu0
      %v1735 = vadd.f32 0.0, %v1734
      %v1736 = vpop.f32.mrb[0].mxu0
      %v1737 = vpop.f32.mrb[0].mxu0
      %v1738 = vadd.f32 0.0, %v1737
      %v1739 = vpop.f32.mrb[0].mxu0
      %1740 = vmatprep.mubr.bf16.mxu0 0
      %1741 = vmatmul.mubr.bf16.gmra.mrb[0].mxu0 %v1687
      %v1742 = vpop.f32.mrb[0].mxu0
      %v1743 = vadd.f32 0.0, %v1742
      %v1744 = vpop.f32.mrb[0].mxu0
      %v1745 = vpop.f32.mrb[0].mxu0
      %v1746 = vadd.f32 0.0, %v1745
      %v1747 = vpop.f32.mrb[0].mxu0
      %1748 = vmatprep.mubr.bf16.mxu0 0
      %1749 = vmatmul.mubr.bf16.gmra.mrb[0].mxu0 %v1690
      %v1750 = vpop.f32.mrb[0].mxu0
      %v1751 = vadd.f32 0.0, %v1750
      %v1752 = vpop.f32.mrb[0].mxu0
      %v1753 = vpop.f32.mrb[0].mxu0
      %v1754 = vadd.f32 0.0, %v1753
      %v1755 = vpop.f32.mrb[0].mxu0
      %1756 = vdwg.mxu0
      %1765 = vrot.lane.b32.xlu0 %v1573, 16
      %v1766 = vpop.permute.xlu0 %1765
      %1767 = vrot.lane.b32.xlu0 %v1576, 16
      %v1768 = vpop.permute.xlu0 %1767
      %1769 = vrot.lane.b32.xlu0 %v1581, 16
      %v1770 = vpop.permute.xlu0 %1769
      %1771 = vrot.lane.b32.xlu0 %v1584, 16
      %v1772 = vpop.permute.xlu0 %1771
      %1773 = vrot.lane.b32.xlu0 %v1589, 16
      %v1774 = vpop.permute.xlu0 %1773
      %1775 = vrot.lane.b32.xlu0 %v1592, 16
      %v1776 = vpop.permute.xlu0 %1775
      %1777 = vrot.lane.b32.xlu0 %v1597, 16
      %v1778 = vpop.permute.xlu0 %1777
      %1779 = vrot.lane.b32.xlu0 %v1600, 16
      %v1780 = vpop.permute.xlu0 %1779
      %1797 = vrot.lane.b32.xlu0 %v1650, 32
      %v1798 = vpop.permute.xlu0 %1797
      %1799 = vrot.lane.b32.xlu0 %v1653, 32
      %v1800 = vpop.permute.xlu0 %1799
      %1801 = vrot.lane.b32.xlu0 %v1658, 32
      %v1802 = vpop.permute.xlu0 %1801
      %1803 = vrot.lane.b32.xlu0 %v1661, 32
      %v1804 = vpop.permute.xlu0 %1803
      %1805 = vrot.lane.b32.xlu0 %v1666, 32
      %v1806 = vpop.permute.xlu0 %1805
      %1807 = vrot.lane.b32.xlu0 %v1669, 32
      %v1808 = vpop.permute.xlu0 %1807
      %1809 = vrot.lane.b32.xlu0 %v1674, 32
      %v1810 = vpop.permute.xlu0 %1809
      %1811 = vrot.lane.b32.xlu0 %v1677, 32
      %v1812 = vpop.permute.xlu0 %1811
      %1829 = vrot.lane.b32.xlu0 %v1727, 48
      %v1830 = vpop.permute.xlu0 %1829
      %1831 = vrot.lane.b32.xlu0 %v1730, 48
      %v1832 = vpop.permute.xlu0 %1831
      %1833 = vrot.lane.b32.xlu0 %v1735, 48
      %v1834 = vpop.permute.xlu0 %1833
      %1835 = vrot.lane.b32.xlu0 %v1738, 48
      %v1836 = vpop.permute.xlu0 %1835
      %1837 = vrot.lane.b32.xlu0 %v1743, 48
      %v1838 = vpop.permute.xlu0 %1837
      %1839 = vrot.lane.b32.xlu0 %v1746, 48
      %v1840 = vpop.permute.xlu0 %1839
      %1841 = vrot.lane.b32.xlu0 %v1751, 48
      %v1842 = vpop.permute.xlu0 %1841
      %1843 = vrot.lane.b32.xlu0 %v1754, 48
      %v1844 = vpop.permute.xlu0 %1843
      %v1853 = vsel %vm687, %v1496, %v1766
      %v1854 = vsel %vm687, %v1499, %v1768
      %v1855 = vsel %vm687, %v1504, %v1770
      %v1856 = vsel %vm687, %v1507, %v1772
      %v1857 = vsel %vm687, %v1512, %v1774
      %v1858 = vsel %vm687, %v1515, %v1776
      %v1859 = vsel %vm687, %v1520, %v1778
      %v1860 = vsel %vm687, %v1523, %v1780
      %v1861 = vsel %vm234, %v1853, %v1798
      %v1862 = vsel %vm234, %v1854, %v1800
      %v1863 = vsel %vm234, %v1855, %v1802
      %v1864 = vsel %vm234, %v1856, %v1804
      %v1865 = vsel %vm234, %v1857, %v1806
      %v1866 = vsel %vm234, %v1858, %v1808
      %v1867 = vsel %vm234, %v1859, %v1810
      %v1868 = vsel %vm234, %v1860, %v1812
      %vm1869 = vcmask 392192
      %v1870 = vsel %vm1869, %v1861, %v1830
      %v1871 = vsel %vm1869, %v1862, %v1832
      %v1872 = vsel %vm1869, %v1863, %v1834
      %v1873 = vsel %vm1869, %v1864, %v1836
      %v1874 = vsel %vm1869, %v1865, %v1838
      %v1875 = vsel %vm1869, %v1866, %v1840
      %v1876 = vsel %vm1869, %v1867, %v1842
      %v1877 = vsel %vm1869, %v1868, %v1844
      %v1878 = vpack.c.bf16 %v1871, %v1870
      %v1879 = vpack.c.bf16 %v1873, %v1872
      %v1880 = vpack.c.bf16 %v1875, %v1874
      %v1881 = vpack.c.bf16 %v1877, %v1876
      %v1882 = vld [vmem:[%s4] sm:$0xf]
      %v1883 = vld [vmem:[%s4 + $0x4] sm:$0xf]
      %v1884 = vld [vmem:[%s4 + $0x8] sm:$0xf]
      %v1885 = vld [vmem:[%s4 + $0xc] sm:$0xf]
      %v1886 = vld [vmem:[%s4 + $0x10] sm:$0xf]
      %v1887 = vld [vmem:[%s4 + $0x14] sm:$0xf]
      %v1888 = vld [vmem:[%s4 + $0x18] sm:$0xf]
      %v1889 = vld [vmem:[%s4 + $0x1c] sm:$0xf]
      %v1898 = vunpack.c.l.b16 %v1882
      %v1899 = vunpack.c.l.b16 %v1883
      %v1900 = vunpack.c.l.b16 %v1884
      %v1901 = vunpack.c.l.b16 %v1885
      %v1902 = vunpack.c.l.b16 %v1886
      %v1903 = vunpack.c.l.b16 %v1887
      %v1904 = vunpack.c.l.b16 %v1888
      %v1905 = vunpack.c.l.b16 %v1889
      %v1906 = vpack.c.b16 %v1899, %v1898
      %v1907 = vpack.c.b16 %v1901, %v1900
      %v1908 = vpack.c.b16 %v1903, %v1902
      %v1909 = vpack.c.b16 %v1905, %v1904
      %v1915 = vsel %vm1080, %v1878, 0
      %v1918 = vsel %vm1080, %v1879, 0
      %v1921 = vsel %vm1080, %v1880, 0
      %v1924 = vsel %vm1080, %v1881, 0
      %1926 = vmatprep.subr.bf16.mxu0 0
      %1927 = vmatpush1.bf16.msra.mxu0 %v1906
      %1928 = vmatprep.subr.bf16.mxu0 0
      %1929 = vmatpush1.bf16.msra.mxu0 %v1907
      %1930 = vmatprep.subr.bf16.mxu0 0
      %1931 = vmatpush1.bf16.msra.mxu0 %v1908
      %1932 = vmatprep.subr.bf16.mxu0 0
      %1933 = vmatpush1.bf16.msra.mxu0 %v1909
      %1934 = vmatprep.subr.bf16.mxu0 0
      %1935 = vmatpush1.bf16.msra.mxu0 0
      %1936 = vmatprep.subr.bf16.mxu0 0
      %1937 = vmatpush1.bf16.msra.mxu0 0
      %1938 = vmatprep.subr.bf16.mxu0 0
      %1939 = vmatpush1.bf16.msra.mxu0 0
      %1940 = vmatprep.subr.bf16.mxu0 0
      %1941 = vmatpush1.bf16.msra.mxu0 0
      %1942 = vmatprep.subr.bf16.mxu0 0
      %1943 = vmatpush1.bf16.msra.mxu0 0
      %1944 = vmatprep.subr.bf16.mxu0 0
      %1945 = vmatpush1.bf16.msra.mxu0 0
      %1946 = vmatprep.subr.bf16.mxu0 0
      %1947 = vmatpush1.bf16.msra.mxu0 0
      %1948 = vmatprep.subr.bf16.mxu0 0
      %1949 = vmatpush1.bf16.msra.mxu0 0
      %1950 = vmatprep.subr.bf16.mxu0 0
      %1951 = vmatpush1.bf16.msra.mxu0 0
      %1952 = vmatprep.subr.bf16.mxu0 0
      %1953 = vmatpush1.bf16.msra.mxu0 0
      %1954 = vmatprep.subr.bf16.mxu0 0
      %1955 = vmatpush1.bf16.msra.mxu0 0
      %1956 = vmatprep.subr.bf16.mxu0 0
      %1957 = vmatpush1.bf16.msra.mxu0 0
      %1958 = vmatprep.mubr.bf16.mxu0 0
      %1959 = vmatmul.mubr.bf16.gmra.mrb[0].mxu0 %v1915
      %v1960 = vpop.f32.mrb[0].mxu0
      %v1961 = vadd.f32 0.0, %v1960
      %v1962 = vpop.f32.mrb[0].mxu0
      %v1963 = vpop.f32.mrb[0].mxu0
      %v1964 = vadd.f32 0.0, %v1963
      %v1965 = vpop.f32.mrb[0].mxu0
      %1966 = vmatprep.mubr.bf16.mxu0 0
      %1967 = vmatmul.mubr.bf16.gmra.mrb[0].mxu0 %v1918
      %v1968 = vpop.f32.mrb[0].mxu0
      %v1969 = vadd.f32 0.0, %v1968
      %v1970 = vpop.f32.mrb[0].mxu0
      %v1971 = vpop.f32.mrb[0].mxu0
      %v1972 = vadd.f32 0.0, %v1971
      %v1973 = vpop.f32.mrb[0].mxu0
      %1974 = vmatprep.mubr.bf16.mxu0 0
      %1975 = vmatmul.mubr.bf16.gmra.mrb[0].mxu0 %v1921
      %v1976 = vpop.f32.mrb[0].mxu0
      %v1977 = vadd.f32 0.0, %v1976
      %v1978 = vpop.f32.mrb[0].mxu0
      %v1979 = vpop.f32.mrb[0].mxu0
      %v1980 = vadd.f32 0.0, %v1979
      %v1981 = vpop.f32.mrb[0].mxu0
      %1982 = vmatprep.mubr.bf16.mxu0 0
      %1983 = vmatmul.mubr.bf16.gmra.mrb[0].mxu0 %v1924
      %v1984 = vpop.f32.mrb[0].mxu0
      %v1985 = vadd.f32 0.0, %v1984
      %v1986 = vpop.f32.mrb[0].mxu0
      %v1987 = vpop.f32.mrb[0].mxu0
      %v1988 = vadd.f32 0.0, %v1987
      %v1989 = vpop.f32.mrb[0].mxu0
      %1990 = vdwg.mxu0
      %1991 = vst.msk [vmem:[%s224] sm:$0xff] %vm234, %v1961
      %1992 = vst.msk [vmem:[%s224 + $0x8] sm:$0xff] %vm234, %v1964
      %1993 = vst.msk [vmem:[%s224 + $0x10] sm:$0xff] %vm234, %v1969
      %1994 = vst.msk [vmem:[%s224 + $0x18] sm:$0xff] %vm234, %v1972
      %1995 = vst.msk [vmem:[%s224 + $0x20] sm:$0xff] %vm234, %v1977
      %1996 = vst.msk [vmem:[%s224 + $0x28] sm:$0xff] %vm234, %v1980
      %1997 = vst.msk [vmem:[%s224 + $0x30] sm:$0xff] %vm234, %v1985
      %1998 = vst.msk [vmem:[%s224 + $0x38] sm:$0xff] %vm234, %v1988
      %p1999 = scmp.lt.s32.totalorder %s16, 1
      %s2000 = scalar_select %p1999, %s16, 1
      %s2001 = smul.addr %s2000, 8
      %s2002 = smul.addr %s2001, 8
      %s2003 = scalar_lea.vmem %s5, %s2002
      // Predicated region
      $region41: #{attention_forward.1} parent=39 // pred_check
        %p2004 = pneg %p144
      $region42: #{attention_forward.1} parent=39 // pred_check_branch
        %2006 = sbr.rel (%p2004) target = $region44
      $region43: #{attention_forward.1} parent=39 // pred_region
        _
      $region44: #{attention_forward.1} parent=39 // pred_fallthru
        _
    $region40: #{attention_forward.1} parent=5 // pred_fallthru
      _
    %p2007 = scmp.le.s32.totalorder 2, %s11
    // Predicated region
    $region45: #{attention_forward.1} parent=5 // pred_check
      %p2008 = pneg %p2007
    $region46: #{attention_forward.1} parent=5 // pred_check_branch
      %2010 = sbr.rel (%p2008) target = $region48
    $region47: #{attention_forward.1} parent=5 // pred_region
      %s2011 = ssub.s32 %s11, 2
      // Predicated region
      $region49: #{attention_forward.1} parent=47 // pred_check
        %p2012 = pneg %p150
      $region50: #{attention_forward.1} parent=47 // pred_check_branch
        %2014 = sbr.rel (%p2012) target = $region52
      $region51: #{attention_forward.1} parent=47 // pred_region
        %p2015 = scmp.lt.s32.totalorder %s17, 1
        %s2016 = scalar_select %p2015, %s17, 1
        %s2017 = smul.addr %s2016, 8
        %s2018 = smul.addr %s2017, 8
        %s2019 = scalar_lea.vmem %s5, %s2018
      $region52: #{attention_forward.1} parent=47 // pred_fallthru
        _
    $region48: #{attention_forward.1} parent=5 // pred_fallthru
      _
  $region6: #{attention_forward.1} parent=0 // loop_footer
    %s15 = sadd.s32 1, %s11
  $region7: #{attention_forward.1} parent=0 // loop_footer_branch
    %10 = sbr.rel target = $region3
  $region8: #{attention_forward.1} parent=0 // loop_exit
    _

</llo_original>
